<compile_context>
chip_gen: v7x
topology: tpu7x:2x2x1
jax: 0.10.0
libtpu: 0.0.40
codegen_flags: <defaults>
</compile_context>

<pallas_src>
import jax
import jax.numpy as jnp
from jax import lax
from jax.experimental import pallas as pl
from jax.experimental.pallas import tpu as pltpu


_VMEM_SPEC = pl.BlockSpec(memory_space=pltpu.MemorySpace.VMEM)


# ----------------------------------------------------------------------------
# Fused Pallas kernel: all LSTM layers + FC, everything VMEM/register-resident
# ----------------------------------------------------------------------------
def _make_fused_kernel(T, BP, H, num_layers):
    """Builds the fused kernel body for static (T, padded batch BP, H, layers)."""

    def kernel(*refs):
        x_ref = refs[0]                                 # (T*BP, D_in) bf16, time-major
        w_refs = refs[1:1 + 3 * num_layers]             # per layer: Wx, Wh, bias
        fcw_ref = refs[1 + 3 * num_layers]              # (T*H, O) bf16
        fcb_ref = refs[2 + 3 * num_layers]              # (1, O)   f32
        pred_ref = refs[3 + 3 * num_layers]             # (BP, O)
        out_ref = refs[4 + 3 * num_layers]              # (BP, T*H)

        x_all = x_ref[...]                              # bf16, fed straight to MXU
        hs = []
        for l in range(num_layers):
            wx = w_refs[3 * l][...]                     # (D_in, 4H) bf16
            wh = w_refs[3 * l + 1][...]                 # (H, 4H)    bf16
            b = w_refs[3 * l + 2][...]                  # (1, 4H)    f32

            # Hoisted input projection + bias: one lane-dense MXU pass per layer;
            # only the h-recurrence matmul remains on the serial critical path.
            xg = jnp.dot(x_all, wx,
                         preferred_element_type=jnp.float32) + b   # (T*BP, 4H) f32

            h = jnp.zeros((BP, H), jnp.float32)
            c = jnp.zeros((BP, H), jnp.float32)
            hs = []
            for t in range(T):                          # static, fully unrolled
                gates = xg[t * BP:(t + 1) * BP, :] + jnp.dot(
                    h.astype(jnp.bfloat16), wh,
                    preferred_element_type=jnp.float32)             # (BP, 4H) f32
                # PyTorch gate order along 4H: i, f, g, o.
                # One full-width sigmoid; g-gate pre-activations were pre-scaled
                # by 2 at pack time, so tanh(g) == 2*sigmoid(2g) - 1 is a VPU fma.
                sig = jax.nn.sigmoid(gates)
                g = 2.0 * sig[:, 2 * H:3 * H] - 1.0
                c = sig[:, H:2 * H] * c + sig[:, 0:H] * g
                h = sig[:, 3 * H:4 * H] * jnp.tanh(c)
                hs.append(h)                            # register-resident

            if l < num_layers - 1:
                # Inter-layer activations never touch VMEM: (T*BP, H) time-major.
                x_all = jnp.concatenate(hs, axis=0).astype(jnp.bfloat16)

        # torch Flatten(1,2) layout: out[b, t*H + j] = h_t[b, j]; one lane-dense
        # (BP, 256) store, and the same register value feeds the FC directly.
        out_flat = jnp.concatenate(hs, axis=1)          # (BP, T*H) f32
        out_ref[...] = out_flat
        pred_ref[...] = jnp.dot(out_flat.astype(jnp.bfloat16), fcw_ref[...],
                                preferred_element_type=jnp.float32) + fcb_ref[...]

    return kernel


# ----------------------------------------------------------------------------
# Host-side weight packing (done once, outside the hot path)
# ----------------------------------------------------------------------------
def pack_params(params, mxu_dtype=jnp.bfloat16):
    """Pre-transpose / fuse PyTorch-layout weights into kernel layout.

    Also folds the tanh(x) = 2*sigmoid(2x) - 1 identity: the g-gate columns of
    W_x, W_h and the bias are pre-scaled by 2 (exact in bf16).
    """
    packed = {"layers": []}
    for layer in params["lstm"]:
        H = layer["w_hh"].shape[1]
        gscale = jnp.concatenate([jnp.ones((2 * H,), jnp.float32),
                                  2.0 * jnp.ones((H,), jnp.float32),
                                  jnp.ones((H,), jnp.float32)])          # (4H,)
        wx = jnp.transpose(layer["w_ih"]).astype(jnp.float32) * gscale   # (D_in, 4H)
        wh = jnp.transpose(layer["w_hh"]).astype(jnp.float32) * gscale   # (H, 4H)
        b = ((layer["b_ih"] + layer["b_hh"]).astype(jnp.float32)
             * gscale).reshape(1, -1)                                    # (1, 4H)
        packed["layers"].append((wx.astype(mxu_dtype), wh.astype(mxu_dtype), b))
    packed["fc_w"] = jnp.transpose(params["fc_w"]).astype(mxu_dtype)     # (F, O)
    packed["fc_b"] = params["fc_b"].reshape(1, -1).astype(jnp.float32)   # (1, O)
    return packed


# ----------------------------------------------------------------------------
# Forward wrapper: single pallas_call
# ----------------------------------------------------------------------------
def lstm_classification_forward(xinput, packed):
    """Mirrors LSTMClassification.forward: returns (prediction, flattened lstm_out)."""
    B, T, D = xinput.shape
    num_layers = len(packed["layers"])
    H = packed["layers"][0][1].shape[0]       # W_h is (H, 4H)
    O = packed["fc_w"].shape[1]

    # Pad batch to a full sublane tile so every per-step (BP, 4H) op is
    # vreg-aligned and all stores are unmasked; padded rows are discarded.
    BP = max(8, -(-B // 8) * 8)
    x_pad = jnp.pad(xinput.astype(jnp.bfloat16), ((0, BP - B), (0, 0), (0, 0)))
    # Time-major flatten (tiny, one-off): (BP, T, D) -> (T*BP, D)
    x_tb = jnp.transpose(x_pad, (1, 0, 2)).reshape(T * BP, D)

    flat_w = [w for triple in packed["layers"] for w in triple]
    n_in = 1 + 3 * num_layers + 2

    kernel = _make_fused_kernel(T, BP, H, num_layers)
    pred, out = pl.pallas_call(
        kernel,
        out_shape=(jax.ShapeDtypeStruct((BP, O), jnp.float32),
                   jax.ShapeDtypeStruct((BP, T * H), jnp.float32)),
        in_specs=[_VMEM_SPEC] * n_in,
        out_specs=(_VMEM_SPEC, _VMEM_SPEC),
    )(x_tb, *flat_w, packed["fc_w"], packed["fc_b"])
    return pred[:B], out[:B]


# ----------------------------------------------------------------------------
# Pure-JAX reference (f32 weights) for correctness check
# ----------------------------------------------------------------------------
def _ref_lstm_layer(x_btd, w_ih, w_hh, b_ih, b_hh):
    B, _, _ = x_btd.shape
    H = w_hh.shape[1]

    def cell(carry, x_t):
        h, c = carry
        gates = x_t @ w_ih.T + b_ih + h @ w_hh.T + b_hh
        i, f, g, o = jnp.split(gates, 4, axis=-1)
        i, f, o = jax.nn.sigmoid(i), jax.nn.sigmoid(f), jax.nn.sigmoid(o)
        g = jnp.tanh(g)
        c = f * c + i * g
        h = o * jnp.tanh(c)
        return (h, c), h

    init = (jnp.zeros((B, H), jnp.float32), jnp.zeros((B, H), jnp.float32))
    _, hs = lax.scan(cell, init, jnp.transpose(x_btd, (1, 0, 2)))
    return jnp.transpose(hs, (1, 0, 2))


def _ref_forward(xinput, params):
    y = xinput.astype(jnp.float32)
    for layer in params["lstm"]:
        y = _ref_lstm_layer(y, layer["w_ih"], layer["w_hh"],
                            layer["b_ih"], layer["b_hh"])
    B, T, H = y.shape
    out = y.reshape(B, T * H)
    pred = out @ params["fc_w"].T + params["fc_b"]
    return pred, out


# ----------------------------------------------------------------------------
# Parameter init (deterministic, PyTorch-style U(-1/sqrt(H), 1/sqrt(H)))
# ----------------------------------------------------------------------------
def init_params(key, input_dim, hidden_dim, target_size, window_size, num_layers):
    params = {"lstm": []}
    k_lstm = 1.0 / jnp.sqrt(hidden_dim)
    for layer_idx in range(num_layers):
        d_in = input_dim if layer_idx == 0 else hidden_dim
        key, k1, k2, k3, k4 = jax.random.split(key, 5)
        params["lstm"].append({
            "w_ih": jax.random.uniform(k1, (4 * hidden_dim, d_in),
                                       jnp.float32, -k_lstm, k_lstm),
            "w_hh": jax.random.uniform(k2, (4 * hidden_dim, hidden_dim),
                                       jnp.float32, -k_lstm, k_lstm),
            "b_ih": jax.random.uniform(k3, (4 * hidden_dim,),
                                       jnp.float32, -k_lstm, k_lstm),
            "b_hh": jax.random.uniform(k4, (4 * hidden_dim,),
                                       jnp.float32, -k_lstm, k_lstm),
        })
    fc_in = hidden_dim * window_size
    k_fc = 1.0 / jnp.sqrt(fc_in)
    key, k1, k2 = jax.random.split(key, 3)
    params["fc_w"] = jax.random.uniform(k1, (target_size, fc_in),
                                        jnp.float32, -k_fc, k_fc)
    params["fc_b"] = jax.random.uniform(k2, (target_size,),
                                        jnp.float32, -k_fc, k_fc)
    return key, params


# ----------------------------------------------------------------------------
if __name__ == "__main__":
    input_dim, hidden_dim, target_size = 16, 32, 4
    window_size, num_layers, batch = 8, 2, 2

    key = jax.random.PRNGKey(0)
    key, params = init_params(key, input_dim, hidden_dim, target_size,
                              window_size, num_layers)
    key, kx = jax.random.split(key)
    xinput = jax.random.normal(kx, (batch, window_size, input_dim), jnp.float32)

    packed = pack_params(params)                    # one-off weight packing (bf16)
    fwd = jax.jit(lstm_classification_forward)

    prediction, out = fwd(xinput, packed)
    jax.block_until_ready((prediction, out))

    pred_ref, out_ref = _ref_forward(xinput, params)
    assert prediction.shape == (batch, target_size)
    assert out.shape == (batch, window_size * hidden_dim)
    # bf16 MXU operands (f32 accumulate) -> tolerance loosened vs. pure-f32.
    assert jnp.allclose(out, out_ref, atol=2e-2, rtol=2e-2)
    assert jnp.allclose(prediction, pred_ref, atol=2e-2, rtol=2e-2)

    print("KERNEL_OK")
</pallas_src>

<mosaic_0001>
module attributes {stable_mosaic.version = 11 : i64} {
  func.func @kernel(%arg0: memref<64x16xbf16, #tpu.memory_space<vmem>>, %arg1: memref<16x128xbf16, #tpu.memory_space<vmem>>, %arg2: memref<32x128xbf16, #tpu.memory_space<vmem>>, %arg3: memref<1x128xf32, #tpu.memory_space<vmem>>, %arg4: memref<32x128xbf16, #tpu.memory_space<vmem>>, %arg5: memref<32x128xbf16, #tpu.memory_space<vmem>>, %arg6: memref<1x128xf32, #tpu.memory_space<vmem>>, %arg7: memref<256x4xbf16, #tpu.memory_space<vmem>>, %arg8: memref<1x4xf32, #tpu.memory_space<vmem>>, %arg9: memref<8x4xf32, #tpu.memory_space<vmem>>, %arg10: memref<8x256xf32, #tpu.memory_space<vmem>>) attributes {dimension_semantics = [], scalar_prefetch = 0 : i64, scratch_operands = 0 : i64, tpu.core_type = #tpu.core_type<tc>} {
    %c0 = arith.constant 0 : index
    %c0_0 = arith.constant 0 : index
    %0 = vector.load %arg0[%c0, %c0_0] : memref<64x16xbf16, #tpu.memory_space<vmem>>, vector<64x16xbf16>
    %c0_1 = arith.constant 0 : index
    %c0_2 = arith.constant 0 : index
    %1 = vector.load %arg1[%c0_1, %c0_2] : memref<16x128xbf16, #tpu.memory_space<vmem>>, vector<16x128xbf16>
    %c0_3 = arith.constant 0 : index
    %c0_4 = arith.constant 0 : index
    %2 = vector.load %arg2[%c0_3, %c0_4] : memref<32x128xbf16, #tpu.memory_space<vmem>>, vector<32x128xbf16>
    %c0_5 = arith.constant 0 : index
    %c0_6 = arith.constant 0 : index
    %3 = vector.load %arg3[%c0_5, %c0_6] : memref<1x128xf32, #tpu.memory_space<vmem>>, vector<1x128xf32>
    %cst = arith.constant dense<0.000000e+00> : vector<64x128xf32>
    %4 = tpu.matmul %0, %1, %cst {dimension_numbers = #tpu.dot_dimension_numbers<[1], [0], [0], [1], [0, 0, 1, 1], [], []>} : vector<64x16xbf16>, vector<16x128xbf16>, vector<64x128xf32> -> vector<64x128xf32>
    %5 = vector.broadcast %3 : vector<1x128xf32> to vector<64x128xf32>
    %6 = arith.addf %4, %5 : vector<64x128xf32>
    %cst_7 = arith.constant 0.000000e+00 : f32
    %7 = vector.broadcast %cst_7 : f32 to vector<8x32xf32>
    %cst_8 = arith.constant 0.000000e+00 : f32
    %8 = vector.broadcast %cst_8 : f32 to vector<8x32xf32>
    %9 = vector.extract_strided_slice %6 {offsets = [0, 0], sizes = [8, 128], strides = [1, 1]} : vector<64x128xf32> to vector<8x128xf32>
    %10 = arith.truncf %7 : vector<8x32xf32> to vector<8x32xbf16>
    %cst_9 = arith.constant dense<0.000000e+00> : vector<8x128xf32>
    %11 = tpu.matmul %10, %2, %cst_9 {dimension_numbers = #tpu.dot_dimension_numbers<[1], [0], [0], [1], [0, 0, 1, 1], [], []>} : vector<8x32xbf16>, vector<32x128xbf16>, vector<8x128xf32> -> vector<8x128xf32>
    %12 = arith.addf %9, %11 : vector<8x128xf32>
    %13 = arith.negf %12 : vector<8x128xf32>
    %14 = math.exp %13 : vector<8x128xf32>
    %cst_10 = arith.constant 1.000000e+00 : f32
    %15 = vector.broadcast %cst_10 : f32 to vector<8x128xf32>
    %16 = arith.addf %15, %14 : vector<8x128xf32>
    %17 = arith.divf %15, %16 : vector<8x128xf32>
    %18 = vector.extract_strided_slice %17 {offsets = [0, 64], sizes = [8, 32], strides = [1, 1]} : vector<8x128xf32> to vector<8x32xf32>
    %cst_11 = arith.constant 2.000000e+00 : f32
    %19 = vector.broadcast %cst_11 : f32 to vector<8x32xf32>
    %20 = arith.mulf %19, %18 : vector<8x32xf32>
    %cst_12 = arith.constant 1.000000e+00 : f32
    %21 = vector.broadcast %cst_12 : f32 to vector<8x32xf32>
    %22 = arith.subf %20, %21 : vector<8x32xf32>
    %23 = vector.extract_strided_slice %17 {offsets = [0, 32], sizes = [8, 32], strides = [1, 1]} : vector<8x128xf32> to vector<8x32xf32>
    %24 = arith.mulf %23, %8 : vector<8x32xf32>
    %25 = vector.extract_strided_slice %17 {offsets = [0, 0], sizes = [8, 32], strides = [1, 1]} : vector<8x128xf32> to vector<8x32xf32>
    %26 = arith.mulf %25, %22 : vector<8x32xf32>
    %27 = arith.addf %24, %26 : vector<8x32xf32>
    %28 = vector.extract_strided_slice %17 {offsets = [0, 96], sizes = [8, 32], strides = [1, 1]} : vector<8x128xf32> to vector<8x32xf32>
    %29 = math.tanh %27 : vector<8x32xf32>
    %30 = arith.mulf %28, %29 : vector<8x32xf32>
    %31 = vector.extract_strided_slice %6 {offsets = [8, 0], sizes = [8, 128], strides = [1, 1]} : vector<64x128xf32> to vector<8x128xf32>
    %32 = arith.truncf %30 : vector<8x32xf32> to vector<8x32xbf16>
    %cst_13 = arith.constant dense<0.000000e+00> : vector<8x128xf32>
    %33 = tpu.matmul %32, %2, %cst_13 {dimension_numbers = #tpu.dot_dimension_numbers<[1], [0], [0], [1], [0, 0, 1, 1], [], []>} : vector<8x32xbf16>, vector<32x128xbf16>, vector<8x128xf32> -> vector<8x128xf32>
    %34 = arith.addf %31, %33 : vector<8x128xf32>
    %35 = arith.negf %34 : vector<8x128xf32>
    %36 = math.exp %35 : vector<8x128xf32>
    %cst_14 = arith.constant 1.000000e+00 : f32
    %37 = vector.broadcast %cst_14 : f32 to vector<8x128xf32>
    %38 = arith.addf %37, %36 : vector<8x128xf32>
    %39 = arith.divf %37, %38 : vector<8x128xf32>
    %40 = vector.extract_strided_slice %39 {offsets = [0, 64], sizes = [8, 32], strides = [1, 1]} : vector<8x128xf32> to vector<8x32xf32>
    %cst_15 = arith.constant 2.000000e+00 : f32
    %41 = vector.broadcast %cst_15 : f32 to vector<8x32xf32>
    %42 = arith.mulf %41, %40 : vector<8x32xf32>
    %cst_16 = arith.constant 1.000000e+00 : f32
    %43 = vector.broadcast %cst_16 : f32 to vector<8x32xf32>
    %44 = arith.subf %42, %43 : vector<8x32xf32>
    %45 = vector.extract_strided_slice %39 {offsets = [0, 32], sizes = [8, 32], strides = [1, 1]} : vector<8x128xf32> to vector<8x32xf32>
    %46 = arith.mulf %45, %27 : vector<8x32xf32>
    %47 = vector.extract_strided_slice %39 {offsets = [0, 0], sizes = [8, 32], strides = [1, 1]} : vector<8x128xf32> to vector<8x32xf32>
    %48 = arith.mulf %47, %44 : vector<8x32xf32>
    %49 = arith.addf %46, %48 : vector<8x32xf32>
    %50 = vector.extract_strided_slice %39 {offsets = [0, 96], sizes = [8, 32], strides = [1, 1]} : vector<8x128xf32> to vector<8x32xf32>
    %51 = math.tanh %49 : vector<8x32xf32>
    %52 = arith.mulf %50, %51 : vector<8x32xf32>
    %53 = vector.extract_strided_slice %6 {offsets = [16, 0], sizes = [8, 128], strides = [1, 1]} : vector<64x128xf32> to vector<8x128xf32>
    %54 = arith.truncf %52 : vector<8x32xf32> to vector<8x32xbf16>
    %cst_17 = arith.constant dense<0.000000e+00> : vector<8x128xf32>
    %55 = tpu.matmul %54, %2, %cst_17 {dimension_numbers = #tpu.dot_dimension_numbers<[1], [0], [0], [1], [0, 0, 1, 1], [], []>} : vector<8x32xbf16>, vector<32x128xbf16>, vector<8x128xf32> -> vector<8x128xf32>
    %56 = arith.addf %53, %55 : vector<8x128xf32>
    %57 = arith.negf %56 : vector<8x128xf32>
    %58 = math.exp %57 : vector<8x128xf32>
    %cst_18 = arith.constant 1.000000e+00 : f32
    %59 = vector.broadcast %cst_18 : f32 to vector<8x128xf32>
    %60 = arith.addf %59, %58 : vector<8x128xf32>
    %61 = arith.divf %59, %60 : vector<8x128xf32>
    %62 = vector.extract_strided_slice %61 {offsets = [0, 64], sizes = [8, 32], strides = [1, 1]} : vector<8x128xf32> to vector<8x32xf32>
    %cst_19 = arith.constant 2.000000e+00 : f32
    %63 = vector.broadcast %cst_19 : f32 to vector<8x32xf32>
    %64 = arith.mulf %63, %62 : vector<8x32xf32>
    %cst_20 = arith.constant 1.000000e+00 : f32
    %65 = vector.broadcast %cst_20 : f32 to vector<8x32xf32>
    %66 = arith.subf %64, %65 : vector<8x32xf32>
    %67 = vector.extract_strided_slice %61 {offsets = [0, 32], sizes = [8, 32], strides = [1, 1]} : vector<8x128xf32> to vector<8x32xf32>
    %68 = arith.mulf %67, %49 : vector<8x32xf32>
    %69 = vector.extract_strided_slice %61 {offsets = [0, 0], sizes = [8, 32], strides = [1, 1]} : vector<8x128xf32> to vector<8x32xf32>
    %70 = arith.mulf %69, %66 : vector<8x32xf32>
    %71 = arith.addf %68, %70 : vector<8x32xf32>
    %72 = vector.extract_strided_slice %61 {offsets = [0, 96], sizes = [8, 32], strides = [1, 1]} : vector<8x128xf32> to vector<8x32xf32>
    %73 = math.tanh %71 : vector<8x32xf32>
    %74 = arith.mulf %72, %73 : vector<8x32xf32>
    %75 = vector.extract_strided_slice %6 {offsets = [24, 0], sizes = [8, 128], strides = [1, 1]} : vector<64x128xf32> to vector<8x128xf32>
    %76 = arith.truncf %74 : vector<8x32xf32> to vector<8x32xbf16>
    %cst_21 = arith.constant dense<0.000000e+00> : vector<8x128xf32>
    %77 = tpu.matmul %76, %2, %cst_21 {dimension_numbers = #tpu.dot_dimension_numbers<[1], [0], [0], [1], [0, 0, 1, 1], [], []>} : vector<8x32xbf16>, vector<32x128xbf16>, vector<8x128xf32> -> vector<8x128xf32>
    %78 = arith.addf %75, %77 : vector<8x128xf32>
    %79 = arith.negf %78 : vector<8x128xf32>
    %80 = math.exp %79 : vector<8x128xf32>
    %cst_22 = arith.constant 1.000000e+00 : f32
    %81 = vector.broadcast %cst_22 : f32 to vector<8x128xf32>
    %82 = arith.addf %81, %80 : vector<8x128xf32>
    %83 = arith.divf %81, %82 : vector<8x128xf32>
    %84 = vector.extract_strided_slice %83 {offsets = [0, 64], sizes = [8, 32], strides = [1, 1]} : vector<8x128xf32> to vector<8x32xf32>
    %cst_23 = arith.constant 2.000000e+00 : f32
    %85 = vector.broadcast %cst_23 : f32 to vector<8x32xf32>
    %86 = arith.mulf %85, %84 : vector<8x32xf32>
    %cst_24 = arith.constant 1.000000e+00 : f32
    %87 = vector.broadcast %cst_24 : f32 to vector<8x32xf32>
    %88 = arith.subf %86, %87 : vector<8x32xf32>
    %89 = vector.extract_strided_slice %83 {offsets = [0, 32], sizes = [8, 32], strides = [1, 1]} : vector<8x128xf32> to vector<8x32xf32>
    %90 = arith.mulf %89, %71 : vector<8x32xf32>
    %91 = vector.extract_strided_slice %83 {offsets = [0, 0], sizes = [8, 32], strides = [1, 1]} : vector<8x128xf32> to vector<8x32xf32>
    %92 = arith.mulf %91, %88 : vector<8x32xf32>
    %93 = arith.addf %90, %92 : vector<8x32xf32>
    %94 = vector.extract_strided_slice %83 {offsets = [0, 96], sizes = [8, 32], strides = [1, 1]} : vector<8x128xf32> to vector<8x32xf32>
    %95 = math.tanh %93 : vector<8x32xf32>
    %96 = arith.mulf %94, %95 : vector<8x32xf32>
    %97 = vector.extract_strided_slice %6 {offsets = [32, 0], sizes = [8, 128], strides = [1, 1]} : vector<64x128xf32> to vector<8x128xf32>
    %98 = arith.truncf %96 : vector<8x32xf32> to vector<8x32xbf16>
    %cst_25 = arith.constant dense<0.000000e+00> : vector<8x128xf32>
    %99 = tpu.matmul %98, %2, %cst_25 {dimension_numbers = #tpu.dot_dimension_numbers<[1], [0], [0], [1], [0, 0, 1, 1], [], []>} : vector<8x32xbf16>, vector<32x128xbf16>, vector<8x128xf32> -> vector<8x128xf32>
    %100 = arith.addf %97, %99 : vector<8x128xf32>
    %101 = arith.negf %100 : vector<8x128xf32>
    %102 = math.exp %101 : vector<8x128xf32>
    %cst_26 = arith.constant 1.000000e+00 : f32
    %103 = vector.broadcast %cst_26 : f32 to vector<8x128xf32>
    %104 = arith.addf %103, %102 : vector<8x128xf32>
    %105 = arith.divf %103, %104 : vector<8x128xf32>
    %106 = vector.extract_strided_slice %105 {offsets = [0, 64], sizes = [8, 32], strides = [1, 1]} : vector<8x128xf32> to vector<8x32xf32>
    %cst_27 = arith.constant 2.000000e+00 : f32
    %107 = vector.broadcast %cst_27 : f32 to vector<8x32xf32>
    %108 = arith.mulf %107, %106 : vector<8x32xf32>
    %cst_28 = arith.constant 1.000000e+00 : f32
    %109 = vector.broadcast %cst_28 : f32 to vector<8x32xf32>
    %110 = arith.subf %108, %109 : vector<8x32xf32>
    %111 = vector.extract_strided_slice %105 {offsets = [0, 32], sizes = [8, 32], strides = [1, 1]} : vector<8x128xf32> to vector<8x32xf32>
    %112 = arith.mulf %111, %93 : vector<8x32xf32>
    %113 = vector.extract_strided_slice %105 {offsets = [0, 0], sizes = [8, 32], strides = [1, 1]} : vector<8x128xf32> to vector<8x32xf32>
    %114 = arith.mulf %113, %110 : vector<8x32xf32>
    %115 = arith.addf %112, %114 : vector<8x32xf32>
    %116 = vector.extract_strided_slice %105 {offsets = [0, 96], sizes = [8, 32], strides = [1, 1]} : vector<8x128xf32> to vector<8x32xf32>
    %117 = math.tanh %115 : vector<8x32xf32>
    %118 = arith.mulf %116, %117 : vector<8x32xf32>
    %119 = vector.extract_strided_slice %6 {offsets = [40, 0], sizes = [8, 128], strides = [1, 1]} : vector<64x128xf32> to vector<8x128xf32>
    %120 = arith.truncf %118 : vector<8x32xf32> to vector<8x32xbf16>
    %cst_29 = arith.constant dense<0.000000e+00> : vector<8x128xf32>
    %121 = tpu.matmul %120, %2, %cst_29 {dimension_numbers = #tpu.dot_dimension_numbers<[1], [0], [0], [1], [0, 0, 1, 1], [], []>} : vector<8x32xbf16>, vector<32x128xbf16>, vector<8x128xf32> -> vector<8x128xf32>
    %122 = arith.addf %119, %121 : vector<8x128xf32>
    %123 = arith.negf %122 : vector<8x128xf32>
    %124 = math.exp %123 : vector<8x128xf32>
    %cst_30 = arith.constant 1.000000e+00 : f32
    %125 = vector.broadcast %cst_30 : f32 to vector<8x128xf32>
    %126 = arith.addf %125, %124 : vector<8x128xf32>
    %127 = arith.divf %125, %126 : vector<8x128xf32>
    %128 = vector.extract_strided_slice %127 {offsets = [0, 64], sizes = [8, 32], strides = [1, 1]} : vector<8x128xf32> to vector<8x32xf32>
    %cst_31 = arith.constant 2.000000e+00 : f32
    %129 = vector.broadcast %cst_31 : f32 to vector<8x32xf32>
    %130 = arith.mulf %129, %128 : vector<8x32xf32>
    %cst_32 = arith.constant 1.000000e+00 : f32
    %131 = vector.broadcast %cst_32 : f32 to vector<8x32xf32>
    %132 = arith.subf %130, %131 : vector<8x32xf32>
    %133 = vector.extract_strided_slice %127 {offsets = [0, 32], sizes = [8, 32], strides = [1, 1]} : vector<8x128xf32> to vector<8x32xf32>
    %134 = arith.mulf %133, %115 : vector<8x32xf32>
    %135 = vector.extract_strided_slice %127 {offsets = [0, 0], sizes = [8, 32], strides = [1, 1]} : vector<8x128xf32> to vector<8x32xf32>
    %136 = arith.mulf %135, %132 : vector<8x32xf32>
    %137 = arith.addf %134, %136 : vector<8x32xf32>
    %138 = vector.extract_strided_slice %127 {offsets = [0, 96], sizes = [8, 32], strides = [1, 1]} : vector<8x128xf32> to vector<8x32xf32>
    %139 = math.tanh %137 : vector<8x32xf32>
    %140 = arith.mulf %138, %139 : vector<8x32xf32>
    %141 = vector.extract_strided_slice %6 {offsets = [48, 0], sizes = [8, 128], strides = [1, 1]} : vector<64x128xf32> to vector<8x128xf32>
    %142 = arith.truncf %140 : vector<8x32xf32> to vector<8x32xbf16>
    %cst_33 = arith.constant dense<0.000000e+00> : vector<8x128xf32>
    %143 = tpu.matmul %142, %2, %cst_33 {dimension_numbers = #tpu.dot_dimension_numbers<[1], [0], [0], [1], [0, 0, 1, 1], [], []>} : vector<8x32xbf16>, vector<32x128xbf16>, vector<8x128xf32> -> vector<8x128xf32>
    %144 = arith.addf %141, %143 : vector<8x128xf32>
    %145 = arith.negf %144 : vector<8x128xf32>
    %146 = math.exp %145 : vector<8x128xf32>
    %cst_34 = arith.constant 1.000000e+00 : f32
    %147 = vector.broadcast %cst_34 : f32 to vector<8x128xf32>
    %148 = arith.addf %147, %146 : vector<8x128xf32>
    %149 = arith.divf %147, %148 : vector<8x128xf32>
    %150 = vector.extract_strided_slice %149 {offsets = [0, 64], sizes = [8, 32], strides = [1, 1]} : vector<8x128xf32> to vector<8x32xf32>
    %cst_35 = arith.constant 2.000000e+00 : f32
    %151 = vector.broadcast %cst_35 : f32 to vector<8x32xf32>
    %152 = arith.mulf %151, %150 : vector<8x32xf32>
    %cst_36 = arith.constant 1.000000e+00 : f32
    %153 = vector.broadcast %cst_36 : f32 to vector<8x32xf32>
    %154 = arith.subf %152, %153 : vector<8x32xf32>
    %155 = vector.extract_strided_slice %149 {offsets = [0, 32], sizes = [8, 32], strides = [1, 1]} : vector<8x128xf32> to vector<8x32xf32>
    %156 = arith.mulf %155, %137 : vector<8x32xf32>
    %157 = vector.extract_strided_slice %149 {offsets = [0, 0], sizes = [8, 32], strides = [1, 1]} : vector<8x128xf32> to vector<8x32xf32>
    %158 = arith.mulf %157, %154 : vector<8x32xf32>
    %159 = arith.addf %156, %158 : vector<8x32xf32>
    %160 = vector.extract_strided_slice %149 {offsets = [0, 96], sizes = [8, 32], strides = [1, 1]} : vector<8x128xf32> to vector<8x32xf32>
    %161 = math.tanh %159 : vector<8x32xf32>
    %162 = arith.mulf %160, %161 : vector<8x32xf32>
    %163 = vector.extract_strided_slice %6 {offsets = [56, 0], sizes = [8, 128], strides = [1, 1]} : vector<64x128xf32> to vector<8x128xf32>
    %164 = arith.truncf %162 : vector<8x32xf32> to vector<8x32xbf16>
    %cst_37 = arith.constant dense<0.000000e+00> : vector<8x128xf32>
    %165 = tpu.matmul %164, %2, %cst_37 {dimension_numbers = #tpu.dot_dimension_numbers<[1], [0], [0], [1], [0, 0, 1, 1], [], []>} : vector<8x32xbf16>, vector<32x128xbf16>, vector<8x128xf32> -> vector<8x128xf32>
    %166 = arith.addf %163, %165 : vector<8x128xf32>
    %167 = arith.negf %166 : vector<8x128xf32>
    %168 = math.exp %167 : vector<8x128xf32>
    %cst_38 = arith.constant 1.000000e+00 : f32
    %169 = vector.broadcast %cst_38 : f32 to vector<8x128xf32>
    %170 = arith.addf %169, %168 : vector<8x128xf32>
    %171 = arith.divf %169, %170 : vector<8x128xf32>
    %172 = vector.extract_strided_slice %171 {offsets = [0, 64], sizes = [8, 32], strides = [1, 1]} : vector<8x128xf32> to vector<8x32xf32>
    %cst_39 = arith.constant 2.000000e+00 : f32
    %173 = vector.broadcast %cst_39 : f32 to vector<8x32xf32>
    %174 = arith.mulf %173, %172 : vector<8x32xf32>
    %cst_40 = arith.constant 1.000000e+00 : f32
    %175 = vector.broadcast %cst_40 : f32 to vector<8x32xf32>
    %176 = arith.subf %174, %175 : vector<8x32xf32>
    %177 = vector.extract_strided_slice %171 {offsets = [0, 32], sizes = [8, 32], strides = [1, 1]} : vector<8x128xf32> to vector<8x32xf32>
    %178 = arith.mulf %177, %159 : vector<8x32xf32>
    %179 = vector.extract_strided_slice %171 {offsets = [0, 0], sizes = [8, 32], strides = [1, 1]} : vector<8x128xf32> to vector<8x32xf32>
    %180 = arith.mulf %179, %176 : vector<8x32xf32>
    %181 = arith.addf %178, %180 : vector<8x32xf32>
    %182 = vector.extract_strided_slice %171 {offsets = [0, 96], sizes = [8, 32], strides = [1, 1]} : vector<8x128xf32> to vector<8x32xf32>
    %183 = math.tanh %181 : vector<8x32xf32>
    %184 = arith.mulf %182, %183 : vector<8x32xf32>
    %185 = tpu.concatenate %30, %52, %74, %96, %118, %140, %162, %184 in 0 : vector<8x32xf32>, vector<8x32xf32>, vector<8x32xf32>, vector<8x32xf32>, vector<8x32xf32>, vector<8x32xf32>, vector<8x32xf32>, vector<8x32xf32> -> vector<64x32xf32>
    %186 = arith.truncf %185 : vector<64x32xf32> to vector<64x32xbf16>
    %c0_41 = arith.constant 0 : index
    %c0_42 = arith.constant 0 : index
    %187 = vector.load %arg4[%c0_41, %c0_42] : memref<32x128xbf16, #tpu.memory_space<vmem>>, vector<32x128xbf16>
    %c0_43 = arith.constant 0 : index
    %c0_44 = arith.constant 0 : index
    %188 = vector.load %arg5[%c0_43, %c0_44] : memref<32x128xbf16, #tpu.memory_space<vmem>>, vector<32x128xbf16>
    %c0_45 = arith.constant 0 : index
    %c0_46 = arith.constant 0 : index
    %189 = vector.load %arg6[%c0_45, %c0_46] : memref<1x128xf32, #tpu.memory_space<vmem>>, vector<1x128xf32>
    %cst_47 = arith.constant dense<0.000000e+00> : vector<64x128xf32>
    %190 = tpu.matmul %186, %187, %cst_47 {dimension_numbers = #tpu.dot_dimension_numbers<[1], [0], [0], [1], [0, 0, 1, 1], [], []>} : vector<64x32xbf16>, vector<32x128xbf16>, vector<64x128xf32> -> vector<64x128xf32>
    %191 = vector.broadcast %189 : vector<1x128xf32> to vector<64x128xf32>
    %192 = arith.addf %190, %191 : vector<64x128xf32>
    %cst_48 = arith.constant 0.000000e+00 : f32
    %193 = vector.broadcast %cst_48 : f32 to vector<8x32xf32>
    %cst_49 = arith.constant 0.000000e+00 : f32
    %194 = vector.broadcast %cst_49 : f32 to vector<8x32xf32>
    %195 = vector.extract_strided_slice %192 {offsets = [0, 0], sizes = [8, 128], strides = [1, 1]} : vector<64x128xf32> to vector<8x128xf32>
    %196 = arith.truncf %193 : vector<8x32xf32> to vector<8x32xbf16>
    %cst_50 = arith.constant dense<0.000000e+00> : vector<8x128xf32>
    %197 = tpu.matmul %196, %188, %cst_50 {dimension_numbers = #tpu.dot_dimension_numbers<[1], [0], [0], [1], [0, 0, 1, 1], [], []>} : vector<8x32xbf16>, vector<32x128xbf16>, vector<8x128xf32> -> vector<8x128xf32>
    %198 = arith.addf %195, %197 : vector<8x128xf32>
    %199 = arith.negf %198 : vector<8x128xf32>
    %200 = math.exp %199 : vector<8x128xf32>
    %cst_51 = arith.constant 1.000000e+00 : f32
    %201 = vector.broadcast %cst_51 : f32 to vector<8x128xf32>
    %202 = arith.addf %201, %200 : vector<8x128xf32>
    %203 = arith.divf %201, %202 : vector<8x128xf32>
    %204 = vector.extract_strided_slice %203 {offsets = [0, 64], sizes = [8, 32], strides = [1, 1]} : vector<8x128xf32> to vector<8x32xf32>
    %cst_52 = arith.constant 2.000000e+00 : f32
    %205 = vector.broadcast %cst_52 : f32 to vector<8x32xf32>
    %206 = arith.mulf %205, %204 : vector<8x32xf32>
    %cst_53 = arith.constant 1.000000e+00 : f32
    %207 = vector.broadcast %cst_53 : f32 to vector<8x32xf32>
    %208 = arith.subf %206, %207 : vector<8x32xf32>
    %209 = vector.extract_strided_slice %203 {offsets = [0, 32], sizes = [8, 32], strides = [1, 1]} : vector<8x128xf32> to vector<8x32xf32>
    %210 = arith.mulf %209, %194 : vector<8x32xf32>
    %211 = vector.extract_strided_slice %203 {offsets = [0, 0], sizes = [8, 32], strides = [1, 1]} : vector<8x128xf32> to vector<8x32xf32>
    %212 = arith.mulf %211, %208 : vector<8x32xf32>
    %213 = arith.addf %210, %212 : vector<8x32xf32>
    %214 = vector.extract_strided_slice %203 {offsets = [0, 96], sizes = [8, 32], strides = [1, 1]} : vector<8x128xf32> to vector<8x32xf32>
    %215 = math.tanh %213 : vector<8x32xf32>
    %216 = arith.mulf %214, %215 : vector<8x32xf32>
    %217 = vector.extract_strided_slice %192 {offsets = [8, 0], sizes = [8, 128], strides = [1, 1]} : vector<64x128xf32> to vector<8x128xf32>
    %218 = arith.truncf %216 : vector<8x32xf32> to vector<8x32xbf16>
    %cst_54 = arith.constant dense<0.000000e+00> : vector<8x128xf32>
    %219 = tpu.matmul %218, %188, %cst_54 {dimension_numbers = #tpu.dot_dimension_numbers<[1], [0], [0], [1], [0, 0, 1, 1], [], []>} : vector<8x32xbf16>, vector<32x128xbf16>, vector<8x128xf32> -> vector<8x128xf32>
    %220 = arith.addf %217, %219 : vector<8x128xf32>
    %221 = arith.negf %220 : vector<8x128xf32>
    %222 = math.exp %221 : vector<8x128xf32>
    %cst_55 = arith.constant 1.000000e+00 : f32
    %223 = vector.broadcast %cst_55 : f32 to vector<8x128xf32>
    %224 = arith.addf %223, %222 : vector<8x128xf32>
    %225 = arith.divf %223, %224 : vector<8x128xf32>
    %226 = vector.extract_strided_slice %225 {offsets = [0, 64], sizes = [8, 32], strides = [1, 1]} : vector<8x128xf32> to vector<8x32xf32>
    %cst_56 = arith.constant 2.000000e+00 : f32
    %227 = vector.broadcast %cst_56 : f32 to vector<8x32xf32>
    %228 = arith.mulf %227, %226 : vector<8x32xf32>
    %cst_57 = arith.constant 1.000000e+00 : f32
    %229 = vector.broadcast %cst_57 : f32 to vector<8x32xf32>
    %230 = arith.subf %228, %229 : vector<8x32xf32>
    %231 = vector.extract_strided_slice %225 {offsets = [0, 32], sizes = [8, 32], strides = [1, 1]} : vector<8x128xf32> to vector<8x32xf32>
    %232 = arith.mulf %231, %213 : vector<8x32xf32>
    %233 = vector.extract_strided_slice %225 {offsets = [0, 0], sizes = [8, 32], strides = [1, 1]} : vector<8x128xf32> to vector<8x32xf32>
    %234 = arith.mulf %233, %230 : vector<8x32xf32>
    %235 = arith.addf %232, %234 : vector<8x32xf32>
    %236 = vector.extract_strided_slice %225 {offsets = [0, 96], sizes = [8, 32], strides = [1, 1]} : vector<8x128xf32> to vector<8x32xf32>
    %237 = math.tanh %235 : vector<8x32xf32>
    %238 = arith.mulf %236, %237 : vector<8x32xf32>
    %239 = vector.extract_strided_slice %192 {offsets = [16, 0], sizes = [8, 128], strides = [1, 1]} : vector<64x128xf32> to vector<8x128xf32>
    %240 = arith.truncf %238 : vector<8x32xf32> to vector<8x32xbf16>
    %cst_58 = arith.constant dense<0.000000e+00> : vector<8x128xf32>
    %241 = tpu.matmul %240, %188, %cst_58 {dimension_numbers = #tpu.dot_dimension_numbers<[1], [0], [0], [1], [0, 0, 1, 1], [], []>} : vector<8x32xbf16>, vector<32x128xbf16>, vector<8x128xf32> -> vector<8x128xf32>
    %242 = arith.addf %239, %241 : vector<8x128xf32>
    %243 = arith.negf %242 : vector<8x128xf32>
    %244 = math.exp %243 : vector<8x128xf32>
    %cst_59 = arith.constant 1.000000e+00 : f32
    %245 = vector.broadcast %cst_59 : f32 to vector<8x128xf32>
    %246 = arith.addf %245, %244 : vector<8x128xf32>
    %247 = arith.divf %245, %246 : vector<8x128xf32>
    %248 = vector.extract_strided_slice %247 {offsets = [0, 64], sizes = [8, 32], strides = [1, 1]} : vector<8x128xf32> to vector<8x32xf32>
    %cst_60 = arith.constant 2.000000e+00 : f32
    %249 = vector.broadcast %cst_60 : f32 to vector<8x32xf32>
    %250 = arith.mulf %249, %248 : vector<8x32xf32>
    %cst_61 = arith.constant 1.000000e+00 : f32
    %251 = vector.broadcast %cst_61 : f32 to vector<8x32xf32>
    %252 = arith.subf %250, %251 : vector<8x32xf32>
    %253 = vector.extract_strided_slice %247 {offsets = [0, 32], sizes = [8, 32], strides = [1, 1]} : vector<8x128xf32> to vector<8x32xf32>
    %254 = arith.mulf %253, %235 : vector<8x32xf32>
    %255 = vector.extract_strided_slice %247 {offsets = [0, 0], sizes = [8, 32], strides = [1, 1]} : vector<8x128xf32> to vector<8x32xf32>
    %256 = arith.mulf %255, %252 : vector<8x32xf32>
    %257 = arith.addf %254, %256 : vector<8x32xf32>
    %258 = vector.extract_strided_slice %247 {offsets = [0, 96], sizes = [8, 32], strides = [1, 1]} : vector<8x128xf32> to vector<8x32xf32>
    %259 = math.tanh %257 : vector<8x32xf32>
    %260 = arith.mulf %258, %259 : vector<8x32xf32>
    %261 = vector.extract_strided_slice %192 {offsets = [24, 0], sizes = [8, 128], strides = [1, 1]} : vector<64x128xf32> to vector<8x128xf32>
    %262 = arith.truncf %260 : vector<8x32xf32> to vector<8x32xbf16>
    %cst_62 = arith.constant dense<0.000000e+00> : vector<8x128xf32>
    %263 = tpu.matmul %262, %188, %cst_62 {dimension_numbers = #tpu.dot_dimension_numbers<[1], [0], [0], [1], [0, 0, 1, 1], [], []>} : vector<8x32xbf16>, vector<32x128xbf16>, vector<8x128xf32> -> vector<8x128xf32>
    %264 = arith.addf %261, %263 : vector<8x128xf32>
    %265 = arith.negf %264 : vector<8x128xf32>
    %266 = math.exp %265 : vector<8x128xf32>
    %cst_63 = arith.constant 1.000000e+00 : f32
    %267 = vector.broadcast %cst_63 : f32 to vector<8x128xf32>
    %268 = arith.addf %267, %266 : vector<8x128xf32>
    %269 = arith.divf %267, %268 : vector<8x128xf32>
    %270 = vector.extract_strided_slice %269 {offsets = [0, 64], sizes = [8, 32], strides = [1, 1]} : vector<8x128xf32> to vector<8x32xf32>
    %cst_64 = arith.constant 2.000000e+00 : f32
    %271 = vector.broadcast %cst_64 : f32 to vector<8x32xf32>
    %272 = arith.mulf %271, %270 : vector<8x32xf32>
    %cst_65 = arith.constant 1.000000e+00 : f32
    %273 = vector.broadcast %cst_65 : f32 to vector<8x32xf32>
    %274 = arith.subf %272, %273 : vector<8x32xf32>
    %275 = vector.extract_strided_slice %269 {offsets = [0, 32], sizes = [8, 32], strides = [1, 1]} : vector<8x128xf32> to vector<8x32xf32>
    %276 = arith.mulf %275, %257 : vector<8x32xf32>
    %277 = vector.extract_strided_slice %269 {offsets = [0, 0], sizes = [8, 32], strides = [1, 1]} : vector<8x128xf32> to vector<8x32xf32>
    %278 = arith.mulf %277, %274 : vector<8x32xf32>
    %279 = arith.addf %276, %278 : vector<8x32xf32>
    %280 = vector.extract_strided_slice %269 {offsets = [0, 96], sizes = [8, 32], strides = [1, 1]} : vector<8x128xf32> to vector<8x32xf32>
    %281 = math.tanh %279 : vector<8x32xf32>
    %282 = arith.mulf %280, %281 : vector<8x32xf32>
    %283 = vector.extract_strided_slice %192 {offsets = [32, 0], sizes = [8, 128], strides = [1, 1]} : vector<64x128xf32> to vector<8x128xf32>
    %284 = arith.truncf %282 : vector<8x32xf32> to vector<8x32xbf16>
    %cst_66 = arith.constant dense<0.000000e+00> : vector<8x128xf32>
    %285 = tpu.matmul %284, %188, %cst_66 {dimension_numbers = #tpu.dot_dimension_numbers<[1], [0], [0], [1], [0, 0, 1, 1], [], []>} : vector<8x32xbf16>, vector<32x128xbf16>, vector<8x128xf32> -> vector<8x128xf32>
    %286 = arith.addf %283, %285 : vector<8x128xf32>
    %287 = arith.negf %286 : vector<8x128xf32>
    %288 = math.exp %287 : vector<8x128xf32>
    %cst_67 = arith.constant 1.000000e+00 : f32
    %289 = vector.broadcast %cst_67 : f32 to vector<8x128xf32>
    %290 = arith.addf %289, %288 : vector<8x128xf32>
    %291 = arith.divf %289, %290 : vector<8x128xf32>
    %292 = vector.extract_strided_slice %291 {offsets = [0, 64], sizes = [8, 32], strides = [1, 1]} : vector<8x128xf32> to vector<8x32xf32>
    %cst_68 = arith.constant 2.000000e+00 : f32
    %293 = vector.broadcast %cst_68 : f32 to vector<8x32xf32>
    %294 = arith.mulf %293, %292 : vector<8x32xf32>
    %cst_69 = arith.constant 1.000000e+00 : f32
    %295 = vector.broadcast %cst_69 : f32 to vector<8x32xf32>
    %296 = arith.subf %294, %295 : vector<8x32xf32>
    %297 = vector.extract_strided_slice %291 {offsets = [0, 32], sizes = [8, 32], strides = [1, 1]} : vector<8x128xf32> to vector<8x32xf32>
    %298 = arith.mulf %297, %279 : vector<8x32xf32>
    %299 = vector.extract_strided_slice %291 {offsets = [0, 0], sizes = [8, 32], strides = [1, 1]} : vector<8x128xf32> to vector<8x32xf32>
    %300 = arith.mulf %299, %296 : vector<8x32xf32>
    %301 = arith.addf %298, %300 : vector<8x32xf32>
    %302 = vector.extract_strided_slice %291 {offsets = [0, 96], sizes = [8, 32], strides = [1, 1]} : vector<8x128xf32> to vector<8x32xf32>
    %303 = math.tanh %301 : vector<8x32xf32>
    %304 = arith.mulf %302, %303 : vector<8x32xf32>
    %305 = vector.extract_strided_slice %192 {offsets = [40, 0], sizes = [8, 128], strides = [1, 1]} : vector<64x128xf32> to vector<8x128xf32>
    %306 = arith.truncf %304 : vector<8x32xf32> to vector<8x32xbf16>
    %cst_70 = arith.constant dense<0.000000e+00> : vector<8x128xf32>
    %307 = tpu.matmul %306, %188, %cst_70 {dimension_numbers = #tpu.dot_dimension_numbers<[1], [0], [0], [1], [0, 0, 1, 1], [], []>} : vector<8x32xbf16>, vector<32x128xbf16>, vector<8x128xf32> -> vector<8x128xf32>
    %308 = arith.addf %305, %307 : vector<8x128xf32>
    %309 = arith.negf %308 : vector<8x128xf32>
    %310 = math.exp %309 : vector<8x128xf32>
    %cst_71 = arith.constant 1.000000e+00 : f32
    %311 = vector.broadcast %cst_71 : f32 to vector<8x128xf32>
    %312 = arith.addf %311, %310 : vector<8x128xf32>
    %313 = arith.divf %311, %312 : vector<8x128xf32>
    %314 = vector.extract_strided_slice %313 {offsets = [0, 64], sizes = [8, 32], strides = [1, 1]} : vector<8x128xf32> to vector<8x32xf32>
    %cst_72 = arith.constant 2.000000e+00 : f32
    %315 = vector.broadcast %cst_72 : f32 to vector<8x32xf32>
    %316 = arith.mulf %315, %314 : vector<8x32xf32>
    %cst_73 = arith.constant 1.000000e+00 : f32
    %317 = vector.broadcast %cst_73 : f32 to vector<8x32xf32>
    %318 = arith.subf %316, %317 : vector<8x32xf32>
    %319 = vector.extract_strided_slice %313 {offsets = [0, 32], sizes = [8, 32], strides = [1, 1]} : vector<8x128xf32> to vector<8x32xf32>
    %320 = arith.mulf %319, %301 : vector<8x32xf32>
    %321 = vector.extract_strided_slice %313 {offsets = [0, 0], sizes = [8, 32], strides = [1, 1]} : vector<8x128xf32> to vector<8x32xf32>
    %322 = arith.mulf %321, %318 : vector<8x32xf32>
    %323 = arith.addf %320, %322 : vector<8x32xf32>
    %324 = vector.extract_strided_slice %313 {offsets = [0, 96], sizes = [8, 32], strides = [1, 1]} : vector<8x128xf32> to vector<8x32xf32>
    %325 = math.tanh %323 : vector<8x32xf32>
    %326 = arith.mulf %324, %325 : vector<8x32xf32>
    %327 = vector.extract_strided_slice %192 {offsets = [48, 0], sizes = [8, 128], strides = [1, 1]} : vector<64x128xf32> to vector<8x128xf32>
    %328 = arith.truncf %326 : vector<8x32xf32> to vector<8x32xbf16>
    %cst_74 = arith.constant dense<0.000000e+00> : vector<8x128xf32>
    %329 = tpu.matmul %328, %188, %cst_74 {dimension_numbers = #tpu.dot_dimension_numbers<[1], [0], [0], [1], [0, 0, 1, 1], [], []>} : vector<8x32xbf16>, vector<32x128xbf16>, vector<8x128xf32> -> vector<8x128xf32>
    %330 = arith.addf %327, %329 : vector<8x128xf32>
    %331 = arith.negf %330 : vector<8x128xf32>
    %332 = math.exp %331 : vector<8x128xf32>
    %cst_75 = arith.constant 1.000000e+00 : f32
    %333 = vector.broadcast %cst_75 : f32 to vector<8x128xf32>
    %334 = arith.addf %333, %332 : vector<8x128xf32>
    %335 = arith.divf %333, %334 : vector<8x128xf32>
    %336 = vector.extract_strided_slice %335 {offsets = [0, 64], sizes = [8, 32], strides = [1, 1]} : vector<8x128xf32> to vector<8x32xf32>
    %cst_76 = arith.constant 2.000000e+00 : f32
    %337 = vector.broadcast %cst_76 : f32 to vector<8x32xf32>
    %338 = arith.mulf %337, %336 : vector<8x32xf32>
    %cst_77 = arith.constant 1.000000e+00 : f32
    %339 = vector.broadcast %cst_77 : f32 to vector<8x32xf32>
    %340 = arith.subf %338, %339 : vector<8x32xf32>
    %341 = vector.extract_strided_slice %335 {offsets = [0, 32], sizes = [8, 32], strides = [1, 1]} : vector<8x128xf32> to vector<8x32xf32>
    %342 = arith.mulf %341, %323 : vector<8x32xf32>
    %343 = vector.extract_strided_slice %335 {offsets = [0, 0], sizes = [8, 32], strides = [1, 1]} : vector<8x128xf32> to vector<8x32xf32>
    %344 = arith.mulf %343, %340 : vector<8x32xf32>
    %345 = arith.addf %342, %344 : vector<8x32xf32>
    %346 = vector.extract_strided_slice %335 {offsets = [0, 96], sizes = [8, 32], strides = [1, 1]} : vector<8x128xf32> to vector<8x32xf32>
    %347 = math.tanh %345 : vector<8x32xf32>
    %348 = arith.mulf %346, %347 : vector<8x32xf32>
    %349 = vector.extract_strided_slice %192 {offsets = [56, 0], sizes = [8, 128], strides = [1, 1]} : vector<64x128xf32> to vector<8x128xf32>
    %350 = arith.truncf %348 : vector<8x32xf32> to vector<8x32xbf16>
    %cst_78 = arith.constant dense<0.000000e+00> : vector<8x128xf32>
    %351 = tpu.matmul %350, %188, %cst_78 {dimension_numbers = #tpu.dot_dimension_numbers<[1], [0], [0], [1], [0, 0, 1, 1], [], []>} : vector<8x32xbf16>, vector<32x128xbf16>, vector<8x128xf32> -> vector<8x128xf32>
    %352 = arith.addf %349, %351 : vector<8x128xf32>
    %353 = arith.negf %352 : vector<8x128xf32>
    %354 = math.exp %353 : vector<8x128xf32>
    %cst_79 = arith.constant 1.000000e+00 : f32
    %355 = vector.broadcast %cst_79 : f32 to vector<8x128xf32>
    %356 = arith.addf %355, %354 : vector<8x128xf32>
    %357 = arith.divf %355, %356 : vector<8x128xf32>
    %358 = vector.extract_strided_slice %357 {offsets = [0, 64], sizes = [8, 32], strides = [1, 1]} : vector<8x128xf32> to vector<8x32xf32>
    %cst_80 = arith.constant 2.000000e+00 : f32
    %359 = vector.broadcast %cst_80 : f32 to vector<8x32xf32>
    %360 = arith.mulf %359, %358 : vector<8x32xf32>
    %cst_81 = arith.constant 1.000000e+00 : f32
    %361 = vector.broadcast %cst_81 : f32 to vector<8x32xf32>
    %362 = arith.subf %360, %361 : vector<8x32xf32>
    %363 = vector.extract_strided_slice %357 {offsets = [0, 32], sizes = [8, 32], strides = [1, 1]} : vector<8x128xf32> to vector<8x32xf32>
    %364 = arith.mulf %363, %345 : vector<8x32xf32>
    %365 = vector.extract_strided_slice %357 {offsets = [0, 0], sizes = [8, 32], strides = [1, 1]} : vector<8x128xf32> to vector<8x32xf32>
    %366 = arith.mulf %365, %362 : vector<8x32xf32>
    %367 = arith.addf %364, %366 : vector<8x32xf32>
    %368 = vector.extract_strided_slice %357 {offsets = [0, 96], sizes = [8, 32], strides = [1, 1]} : vector<8x128xf32> to vector<8x32xf32>
    %369 = math.tanh %367 : vector<8x32xf32>
    %370 = arith.mulf %368, %369 : vector<8x32xf32>
    %371 = tpu.concatenate %216, %238, %260, %282, %304, %326, %348, %370 in 1 : vector<8x32xf32>, vector<8x32xf32>, vector<8x32xf32>, vector<8x32xf32>, vector<8x32xf32>, vector<8x32xf32>, vector<8x32xf32>, vector<8x32xf32> -> vector<8x256xf32>
    %c0_82 = arith.constant 0 : index
    %c0_83 = arith.constant 0 : index
    %372 = vector.load %arg10[%c0_82, %c0_83] : memref<8x256xf32, #tpu.memory_space<vmem>>, vector<8x256xf32>
    tpu.vector_store %arg10[%c0_82, %c0_83], %371 {strides = array<i32>} : memref<8x256xf32, #tpu.memory_space<vmem>>, vector<8x256xf32>,
    %373 = arith.truncf %371 : vector<8x256xf32> to vector<8x256xbf16>
    %c0_84 = arith.constant 0 : index
    %c0_85 = arith.constant 0 : index
    %374 = vector.load %arg7[%c0_84, %c0_85] : memref<256x4xbf16, #tpu.memory_space<vmem>>, vector<256x4xbf16>
    %cst_86 = arith.constant dense<0.000000e+00> : vector<8x4xf32>
    %375 = tpu.matmul %373, %374, %cst_86 {dimension_numbers = #tpu.dot_dimension_numbers<[1], [0], [0], [1], [0, 0, 1, 1], [], []>} : vector<8x256xbf16>, vector<256x4xbf16>, vector<8x4xf32> -> vector<8x4xf32>
    %c0_87 = arith.constant 0 : index
    %c0_88 = arith.constant 0 : index
    %376 = vector.load %arg8[%c0_87, %c0_88] : memref<1x4xf32, #tpu.memory_space<vmem>>, vector<1x4xf32>
    %377 = vector.broadcast %376 : vector<1x4xf32> to vector<8x4xf32>
    %378 = arith.addf %375, %377 : vector<8x4xf32>
    %c0_89 = arith.constant 0 : index
    %c0_90 = arith.constant 0 : index
    %379 = vector.load %arg9[%c0_89, %c0_90] : memref<8x4xf32, #tpu.memory_space<vmem>>, vector<8x4xf32>
    tpu.vector_store %arg9[%c0_89, %c0_90], %378 {strides = array<i32>} : memref<8x4xf32, #tpu.memory_space<vmem>>, vector<8x4xf32>,
    return
  }
}

</mosaic_0001>

<llo_original>
// kernel: lstm_classification_forward.1
$region0: #{lstm_classification_forward.1}
  #allocation0 [shape = 'u32[]', space=smem, size = 0x4, offset = 0x4, fixed_abs, tag = 'smem constant byte address 0x4 - core index']
  #allocation1 [shape = 'u32[144,128]{1,0:T(1,128)}', space=vmem, size = 0x12000, scoped, tag = 'internal scratch']
  %s0 = inlined_call_operand.vmem [shape: bf16[64,16], index: 0, kind: input, shape index: {}]
  %s1 = inlined_call_operand.vmem [shape: bf16[16,128], index: 1, kind: input, shape index: {}]
  %s2 = inlined_call_operand.vmem [shape: bf16[32,128], index: 2, kind: input, shape index: {}]
  %s3 = inlined_call_operand.vmem [shape: f32[1,128], index: 3, kind: input, shape index: {}]
  %s4 = inlined_call_operand.vmem [shape: bf16[32,128], index: 4, kind: input, shape index: {}]
  %s5 = inlined_call_operand.vmem [shape: bf16[32,128], index: 5, kind: input, shape index: {}]
  %s6 = inlined_call_operand.vmem [shape: f32[1,128], index: 6, kind: input, shape index: {}]
  %s7 = inlined_call_operand.vmem [shape: bf16[256,4], index: 7, kind: input, shape index: {}]
  %s8 = inlined_call_operand.vmem [shape: f32[1,4], index: 8, kind: input, shape index: {}]
  %s9 = inlined_call_operand.vmem [shape: f32[8,4], index: 9, kind: output, shape index: {0}]
  %s10 = inlined_call_operand.vmem [shape: f32[8,256], index: 10, kind: output, shape index: {1}]
  %11 = xla_tuple %s9, %s10
  %s12 = sld [smem:[#allocation0]]
  $region54: #{lstm_classification_forward.1} parent=0
    _
  %s14 = ssub.s32 1, %s12
  %s15 = scalar_select 0, %s14, %s12
  // Predicated region
  $region2: #{lstm_classification_forward.1} parent=0 // pred_check
    _
  $region3: #{lstm_classification_forward.1} parent=0 // pred_check_branch
    %17 = sbr.rel (0) target = $region5
  $region4: #{lstm_classification_forward.1} parent=0 // pred_region
    _
  $region5: #{lstm_classification_forward.1} parent=0 // pred_fallthru
    _
  // Predicated region
  $region6: #{lstm_classification_forward.1} parent=0 // pred_check
    _
  $region7: #{lstm_classification_forward.1} parent=0 // pred_check_branch
    %19 = sbr.rel (0) target = $region9
  $region8: #{lstm_classification_forward.1} parent=0 // pred_region
    _
  $region9: #{lstm_classification_forward.1} parent=0 // pred_fallthru
    _
  // Predicated region
  $region10: #{lstm_classification_forward.1} parent=0 // pred_check
    _
  $region11: #{lstm_classification_forward.1} parent=0 // pred_check_branch
    %21 = sbr.rel (0) target = $region13
  $region12: #{lstm_classification_forward.1} parent=0 // pred_region
    _
  $region13: #{lstm_classification_forward.1} parent=0 // pred_fallthru
    _
  // Predicated region
  $region14: #{lstm_classification_forward.1} parent=0 // pred_check
    _
  $region15: #{lstm_classification_forward.1} parent=0 // pred_check_branch
    %23 = sbr.rel (0) target = $region17
  $region16: #{lstm_classification_forward.1} parent=0 // pred_region
    _
  $region17: #{lstm_classification_forward.1} parent=0 // pred_fallthru
    _
  // Predicated region
  $region18: #{lstm_classification_forward.1} parent=0 // pred_check
    _
  $region19: #{lstm_classification_forward.1} parent=0 // pred_check_branch
    %25 = sbr.rel (0) target = $region21
  $region20: #{lstm_classification_forward.1} parent=0 // pred_region
    _
  $region21: #{lstm_classification_forward.1} parent=0 // pred_fallthru
    _
  // Predicated region
  $region22: #{lstm_classification_forward.1} parent=0 // pred_check
    _
  $region23: #{lstm_classification_forward.1} parent=0 // pred_check_branch
    %27 = sbr.rel (0) target = $region25
  $region24: #{lstm_classification_forward.1} parent=0 // pred_region
    _
  $region25: #{lstm_classification_forward.1} parent=0 // pred_fallthru
    _
  // Predicated region
  $region26: #{lstm_classification_forward.1} parent=0 // pred_check
    _
  $region27: #{lstm_classification_forward.1} parent=0 // pred_check_branch
    %29 = sbr.rel (0) target = $region29
  $region28: #{lstm_classification_forward.1} parent=0 // pred_region
    _
  $region29: #{lstm_classification_forward.1} parent=0 // pred_fallthru
    _
  // Predicated region
  $region30: #{lstm_classification_forward.1} parent=0 // pred_check
    _
  $region31: #{lstm_classification_forward.1} parent=0 // pred_check_branch
    %31 = sbr.rel (0) target = $region33
  $region32: #{lstm_classification_forward.1} parent=0 // pred_region
    _
  $region33: #{lstm_classification_forward.1} parent=0 // pred_fallthru
    _
  // Predicated region
  $region34: #{lstm_classification_forward.1} parent=0 // pred_check
    _
  $region35: #{lstm_classification_forward.1} parent=0 // pred_check_branch
    %33 = sbr.rel (0) target = $region37
  $region36: #{lstm_classification_forward.1} parent=0 // pred_region
    _
  $region37: #{lstm_classification_forward.1} parent=0 // pred_fallthru
    _
  %v35 = vld [vmem:[%s0] sm:$0xf]
  %v36 = vld [vmem:[%s0 + $0x4] sm:$0xf]
  %v37 = vld [vmem:[%s0 + $0x8] sm:$0xf]
  %v38 = vld [vmem:[%s0 + $0xc] sm:$0xf]
  %v39 = vld [vmem:[%s0 + $0x10] sm:$0xf]
  %v40 = vld [vmem:[%s0 + $0x14] sm:$0xf]
  %v41 = vld [vmem:[%s0 + $0x18] sm:$0xf]
  %v42 = vld [vmem:[%s0 + $0x1c] sm:$0xf]
  %v43 = vld [vmem:[%s1] sm:$0xf]
  %v44 = vld [vmem:[%s1 + $0x4] sm:$0xf]
  %v45 = vld [vmem:[%s2] sm:$0xf]
  %v46 = vld [vmem:[%s2 + $0x4] sm:$0xf]
  %v47 = vld [vmem:[%s2 + $0x8] sm:$0xf]
  %v48 = vld [vmem:[%s2 + $0xc] sm:$0xf]
  %v49 = vld [vmem:[%s3] sm:$0x1]
  %v51 = vlaneseq
  %v52 = vshrl.u32 %v51, 7
  %v53 = vsub.s32 0, %v52
  %v54 = vrot.slane %v49, %v53
  %v64 = vunpack.c.l.b16 %v35
  %v65 = vunpack.c.l.b16 %v36
  %v66 = vunpack.c.l.b16 %v37
  %v67 = vunpack.c.l.b16 %v38
  %v68 = vunpack.c.l.b16 %v39
  %v69 = vunpack.c.l.b16 %v40
  %v70 = vunpack.c.l.b16 %v41
  %v71 = vunpack.c.l.b16 %v42
  %v72 = vpack.c.b16 %v65, %v64
  %v73 = vpack.c.b16 %v67, %v66
  %v74 = vpack.c.b16 %v69, %v68
  %v75 = vpack.c.b16 %v71, %v70
  %v78 = vunpack.c.l.b16 %v43
  %v79 = vunpack.c.l.b16 %v44
  %v80 = vpack.c.b16 %v79, %v78
  %vm82 = vcmask 130048
  %v84 = vsel %vm82, %v72, 0
  %v87 = vsel %vm82, %v73, 0
  %v90 = vsel %vm82, %v74, 0
  %v93 = vsel %vm82, %v75, 0
  %95 = vmatprep.subr.bf16.mxu0 0
  %96 = vmatpush1.bf16.msra.mxu0 %v80
  %97 = vmatprep.subr.bf16.mxu0 0
  %98 = vmatpush1.bf16.msra.mxu0 0
  %99 = vmatprep.subr.bf16.mxu0 0
  %100 = vmatpush1.bf16.msra.mxu0 0
  %101 = vmatprep.subr.bf16.mxu0 0
  %102 = vmatpush1.bf16.msra.mxu0 0
  %103 = vmatprep.subr.bf16.mxu0 0
  %104 = vmatpush1.bf16.msra.mxu0 0
  %105 = vmatprep.subr.bf16.mxu0 0
  %106 = vmatpush1.bf16.msra.mxu0 0
  %107 = vmatprep.subr.bf16.mxu0 0
  %108 = vmatpush1.bf16.msra.mxu0 0
  %109 = vmatprep.subr.bf16.mxu0 0
  %110 = vmatpush1.bf16.msra.mxu0 0
  %111 = vmatprep.subr.bf16.mxu0 0
  %112 = vmatpush1.bf16.msra.mxu0 0
  %113 = vmatprep.subr.bf16.mxu0 0
  %114 = vmatpush1.bf16.msra.mxu0 0
  %115 = vmatprep.subr.bf16.mxu0 0
  %116 = vmatpush1.bf16.msra.mxu0 0
  %117 = vmatprep.subr.bf16.mxu0 0
  %118 = vmatpush1.bf16.msra.mxu0 0
  %119 = vmatprep.subr.bf16.mxu0 0
  %120 = vmatpush1.bf16.msra.mxu0 0
  %121 = vmatprep.subr.bf16.mxu0 0
  %122 = vmatpush1.bf16.msra.mxu0 0
  %123 = vmatprep.subr.bf16.mxu0 0
  %124 = vmatpush1.bf16.msra.mxu0 0
  %125 = vmatprep.subr.bf16.mxu0 0
  %126 = vmatpush1.bf16.msra.mxu0 0
  %127 = vmatprep.mubr.bf16.mxu0 0
  %128 = vmatmul.mubr.bf16.gmra.mrb[0].mxu0 %v84
  %v129 = vpop.f32.mrb[0].mxu0
  %v130 = vadd.f32 %v54, %v129
  %v131 = vpop.f32.mrb[0].mxu0
  %v132 = vpop.f32.mrb[0].mxu0
  %v133 = vadd.f32 %v54, %v132
  %v134 = vpop.f32.mrb[0].mxu0
  %135 = vmatprep.mubr.bf16.mxu0 0
  %136 = vmatmul.mubr.bf16.gmra.mrb[0].mxu0 %v87
  %v137 = vpop.f32.mrb[0].mxu0
  %v138 = vadd.f32 %v54, %v137
  %v139 = vpop.f32.mrb[0].mxu0
  %v140 = vpop.f32.mrb[0].mxu0
  %v141 = vadd.f32 %v54, %v140
  %v142 = vpop.f32.mrb[0].mxu0
  %143 = vmatprep.mubr.bf16.mxu0 0
  %144 = vmatmul.mubr.bf16.gmra.mrb[0].mxu0 %v90
  %v145 = vpop.f32.mrb[0].mxu0
  %v146 = vadd.f32 %v54, %v145
  %v147 = vpop.f32.mrb[0].mxu0
  %v148 = vpop.f32.mrb[0].mxu0
  %v149 = vadd.f32 %v54, %v148
  %v150 = vpop.f32.mrb[0].mxu0
  %151 = vmatprep.mubr.bf16.mxu0 0
  %152 = vmatmul.mubr.bf16.gmra.mrb[0].mxu0 %v93
  %v153 = vpop.f32.mrb[0].mxu0
  %v154 = vadd.f32 %v54, %v153
  %v155 = vpop.f32.mrb[0].mxu0
  %v156 = vpop.f32.mrb[0].mxu0
  %v157 = vadd.f32 %v54, %v156
  %v158 = vpop.f32.mrb[0].mxu0
  %159 = vdwg.mxu0
  %v164 = vunpack.c.l.b16 %v45
  %v165 = vunpack.c.l.b16 %v46
  %v166 = vunpack.c.l.b16 %v47
  %v167 = vunpack.c.l.b16 %v48
  %v168 = vpack.c.b16 %v165, %v164
  %v169 = vpack.c.b16 %v167, %v166
  %vm172 = vcmask 261120
  %v174 = vsel %vm172, 0, 0
  %176 = vmatprep.subr.bf16.mxu0 0
  %177 = vmatpush1.bf16.msra.mxu0 %v168
  %178 = vmatprep.subr.bf16.mxu0 0
  %179 = vmatpush1.bf16.msra.mxu0 %v169
  %180 = vmatprep.subr.bf16.mxu0 0
  %181 = vmatpush1.bf16.msra.mxu0 0
  %182 = vmatprep.subr.bf16.mxu0 0
  %183 = vmatpush1.bf16.msra.mxu0 0
  %184 = vmatprep.subr.bf16.mxu0 0
  %185 = vmatpush1.bf16.msra.mxu0 0
  %186 = vmatprep.subr.bf16.mxu0 0
  %187 = vmatpush1.bf16.msra.mxu0 0
  %188 = vmatprep.subr.bf16.mxu0 0
  %189 = vmatpush1.bf16.msra.mxu0 0
  %190 = vmatprep.subr.bf16.mxu0 0
  %191 = vmatpush1.bf16.msra.mxu0 0
  %192 = vmatprep.subr.bf16.mxu0 0
  %193 = vmatpush1.bf16.msra.mxu0 0
  %194 = vmatprep.subr.bf16.mxu0 0
  %195 = vmatpush1.bf16.msra.mxu0 0
  %196 = vmatprep.subr.bf16.mxu0 0
  %197 = vmatpush1.bf16.msra.mxu0 0
  %198 = vmatprep.subr.bf16.mxu0 0
  %199 = vmatpush1.bf16.msra.mxu0 0
  %200 = vmatprep.subr.bf16.mxu0 0
  %201 = vmatpush1.bf16.msra.mxu0 0
  %202 = vmatprep.subr.bf16.mxu0 0
  %203 = vmatpush1.bf16.msra.mxu0 0
  %204 = vmatprep.subr.bf16.mxu0 0
  %205 = vmatpush1.bf16.msra.mxu0 0
  %206 = vmatprep.subr.bf16.mxu0 0
  %207 = vmatpush1.bf16.msra.mxu0 0
  %208 = vmatprep.mubr.bf16.mxu0 0
  %209 = vmatmul.mubr.bf16.gmra.mrb[0].mxu0 %v174
  %v210 = vpop.f32.mrb[0].mxu0
  %v211 = vadd.f32 0.0, %v210
  %v212 = vpop.f32.mrb[0].mxu0
  %v213 = vpop.f32.mrb[0].mxu0
  %v214 = vpop.f32.mrb[0].mxu0
  %215 = vdwg.mxu0
  %v216 = vadd.f32 %v130, %v211
  %v217 = vxor.u32 %v216, 2147483648
  %v218 = vmul.f32 %v217, 1.442695
  %v219 = vpow.pop %v218
  %v220 = vadd.f32 %v219, 1.0
  %v221 = vrcp.pop %v220
  %v222 = vmul.f32 1.0, %v221
  %v223 = vmul.f32 %v222, 2.0
  %v224 = vsub.f32 %v223, 1.0
  %v225 = vmul.f32 %v222, 0.0
  %227 = vrot.lane.b32.xlu0 %v224, 64
  %v228 = vpop.permute.xlu0 %227
  %v230 = vmul.f32 %v222, %v228
  %232 = vrot.lane.b32.xlu0 %v230, 32
  %v233 = vpop.permute.xlu0 %232
  %v235 = vadd.f32 %v225, %v233
  %v236 = vtanh.pop %v235
  %238 = vrot.lane.b32.xlu0 %v236, 64
  %v239 = vpop.permute.xlu0 %238
  %v241 = vmul.f32 %v222, %v239
  %v242 = vpack.c.bf16 %v241, %v241
  %244 = vrot.lane.b32.xlu0 %v242, 32
  %v245 = vpop.permute.xlu0 %244
  %v247 = vsel %vm172, %v245, 0
  %249 = vmatprep.subr.bf16.mxu0 0
  %250 = vmatpush1.bf16.msra.mxu0 %v168
  %251 = vmatprep.subr.bf16.mxu0 0
  %252 = vmatpush1.bf16.msra.mxu0 %v169
  %253 = vmatprep.subr.bf16.mxu0 0
  %254 = vmatpush1.bf16.msra.mxu0 0
  %255 = vmatprep.subr.bf16.mxu0 0
  %256 = vmatpush1.bf16.msra.mxu0 0
  %257 = vmatprep.subr.bf16.mxu0 0
  %258 = vmatpush1.bf16.msra.mxu0 0
  %259 = vmatprep.subr.bf16.mxu0 0
  %260 = vmatpush1.bf16.msra.mxu0 0
  %261 = vmatprep.subr.bf16.mxu0 0
  %262 = vmatpush1.bf16.msra.mxu0 0
  %263 = vmatprep.subr.bf16.mxu0 0
  %264 = vmatpush1.bf16.msra.mxu0 0
  %265 = vmatprep.subr.bf16.mxu0 0
  %266 = vmatpush1.bf16.msra.mxu0 0
  %267 = vmatprep.subr.bf16.mxu0 0
  %268 = vmatpush1.bf16.msra.mxu0 0
  %269 = vmatprep.subr.bf16.mxu0 0
  %270 = vmatpush1.bf16.msra.mxu0 0
  %271 = vmatprep.subr.bf16.mxu0 0
  %272 = vmatpush1.bf16.msra.mxu0 0
  %273 = vmatprep.subr.bf16.mxu0 0
  %274 = vmatpush1.bf16.msra.mxu0 0
  %275 = vmatprep.subr.bf16.mxu0 0
  %276 = vmatpush1.bf16.msra.mxu0 0
  %277 = vmatprep.subr.bf16.mxu0 0
  %278 = vmatpush1.bf16.msra.mxu0 0
  %279 = vmatprep.subr.bf16.mxu0 0
  %280 = vmatpush1.bf16.msra.mxu0 0
  %281 = vmatprep.mubr.bf16.mxu0 0
  %282 = vmatmul.mubr.bf16.gmra.mrb[0].mxu0 %v247
  %v283 = vpop.f32.mrb[0].mxu0
  %v284 = vadd.f32 0.0, %v283
  %v285 = vpop.f32.mrb[0].mxu0
  %v286 = vpop.f32.mrb[0].mxu0
  %v287 = vpop.f32.mrb[0].mxu0
  %288 = vdwg.mxu0
  %v289 = vadd.f32 %v133, %v284
  %v290 = vxor.u32 %v289, 2147483648
  %v291 = vmul.f32 %v290, 1.442695
  %v292 = vpow.pop %v291
  %v293 = vadd.f32 %v292, 1.0
  %v294 = vrcp.pop %v293
  %v295 = vmul.f32 1.0, %v294
  %v296 = vmul.f32 %v295, 2.0
  %v297 = vsub.f32 %v296, 1.0
  %v298 = vmul.f32 %v295, %v235
  %300 = vrot.lane.b32.xlu0 %v297, 64
  %v301 = vpop.permute.xlu0 %300
  %v303 = vmul.f32 %v295, %v301
  %305 = vrot.lane.b32.xlu0 %v303, 32
  %v306 = vpop.permute.xlu0 %305
  %v308 = vadd.f32 %v298, %v306
  %v309 = vtanh.pop %v308
  %311 = vrot.lane.b32.xlu0 %v309, 64
  %v312 = vpop.permute.xlu0 %311
  %v314 = vmul.f32 %v295, %v312
  %v315 = vpack.c.bf16 %v314, %v314
  %317 = vrot.lane.b32.xlu0 %v315, 32
  %v318 = vpop.permute.xlu0 %317
  %v320 = vsel %vm172, %v318, 0
  %322 = vmatprep.subr.bf16.mxu0 0
  %323 = vmatpush1.bf16.msra.mxu0 %v168
  %324 = vmatprep.subr.bf16.mxu0 0
  %325 = vmatpush1.bf16.msra.mxu0 %v169
  %326 = vmatprep.subr.bf16.mxu0 0
  %327 = vmatpush1.bf16.msra.mxu0 0
  %328 = vmatprep.subr.bf16.mxu0 0
  %329 = vmatpush1.bf16.msra.mxu0 0
  %330 = vmatprep.subr.bf16.mxu0 0
  %331 = vmatpush1.bf16.msra.mxu0 0
  %332 = vmatprep.subr.bf16.mxu0 0
  %333 = vmatpush1.bf16.msra.mxu0 0
  %334 = vmatprep.subr.bf16.mxu0 0
  %335 = vmatpush1.bf16.msra.mxu0 0
  %336 = vmatprep.subr.bf16.mxu0 0
  %337 = vmatpush1.bf16.msra.mxu0 0
  %338 = vmatprep.subr.bf16.mxu0 0
  %339 = vmatpush1.bf16.msra.mxu0 0
  %340 = vmatprep.subr.bf16.mxu0 0
  %341 = vmatpush1.bf16.msra.mxu0 0
  %342 = vmatprep.subr.bf16.mxu0 0
  %343 = vmatpush1.bf16.msra.mxu0 0
  %344 = vmatprep.subr.bf16.mxu0 0
  %345 = vmatpush1.bf16.msra.mxu0 0
  %346 = vmatprep.subr.bf16.mxu0 0
  %347 = vmatpush1.bf16.msra.mxu0 0
  %348 = vmatprep.subr.bf16.mxu0 0
  %349 = vmatpush1.bf16.msra.mxu0 0
  %350 = vmatprep.subr.bf16.mxu0 0
  %351 = vmatpush1.bf16.msra.mxu0 0
  %352 = vmatprep.subr.bf16.mxu0 0
  %353 = vmatpush1.bf16.msra.mxu0 0
  %354 = vmatprep.mubr.bf16.mxu0 0
  %355 = vmatmul.mubr.bf16.gmra.mrb[0].mxu0 %v320
  %v356 = vpop.f32.mrb[0].mxu0
  %v357 = vadd.f32 0.0, %v356
  %v358 = vpop.f32.mrb[0].mxu0
  %v359 = vpop.f32.mrb[0].mxu0
  %v360 = vpop.f32.mrb[0].mxu0
  %361 = vdwg.mxu0
  %v362 = vadd.f32 %v138, %v357
  %v363 = vxor.u32 %v362, 2147483648
  %v364 = vmul.f32 %v363, 1.442695
  %v365 = vpow.pop %v364
  %v366 = vadd.f32 %v365, 1.0
  %v367 = vrcp.pop %v366
  %v368 = vmul.f32 1.0, %v367
  %v369 = vmul.f32 %v368, 2.0
  %v370 = vsub.f32 %v369, 1.0
  %v371 = vmul.f32 %v368, %v308
  %373 = vrot.lane.b32.xlu0 %v370, 64
  %v374 = vpop.permute.xlu0 %373
  %v376 = vmul.f32 %v368, %v374
  %378 = vrot.lane.b32.xlu0 %v376, 32
  %v379 = vpop.permute.xlu0 %378
  %v381 = vadd.f32 %v371, %v379
  %v382 = vtanh.pop %v381
  %384 = vrot.lane.b32.xlu0 %v382, 64
  %v385 = vpop.permute.xlu0 %384
  %v387 = vmul.f32 %v368, %v385
  %v388 = vpack.c.bf16 %v387, %v387
  %390 = vrot.lane.b32.xlu0 %v388, 32
  %v391 = vpop.permute.xlu0 %390
  %v393 = vsel %vm172, %v391, 0
  %395 = vmatprep.subr.bf16.mxu0 0
  %396 = vmatpush1.bf16.msra.mxu0 %v168
  %397 = vmatprep.subr.bf16.mxu0 0
  %398 = vmatpush1.bf16.msra.mxu0 %v169
  %399 = vmatprep.subr.bf16.mxu0 0
  %400 = vmatpush1.bf16.msra.mxu0 0
  %401 = vmatprep.subr.bf16.mxu0 0
  %402 = vmatpush1.bf16.msra.mxu0 0
  %403 = vmatprep.subr.bf16.mxu0 0
  %404 = vmatpush1.bf16.msra.mxu0 0
  %405 = vmatprep.subr.bf16.mxu0 0
  %406 = vmatpush1.bf16.msra.mxu0 0
  %407 = vmatprep.subr.bf16.mxu0 0
  %408 = vmatpush1.bf16.msra.mxu0 0
  %409 = vmatprep.subr.bf16.mxu0 0
  %410 = vmatpush1.bf16.msra.mxu0 0
  %411 = vmatprep.subr.bf16.mxu0 0
  %412 = vmatpush1.bf16.msra.mxu0 0
  %413 = vmatprep.subr.bf16.mxu0 0
  %414 = vmatpush1.bf16.msra.mxu0 0
  %415 = vmatprep.subr.bf16.mxu0 0
  %416 = vmatpush1.bf16.msra.mxu0 0
  %417 = vmatprep.subr.bf16.mxu0 0
  %418 = vmatpush1.bf16.msra.mxu0 0
  %419 = vmatprep.subr.bf16.mxu0 0
  %420 = vmatpush1.bf16.msra.mxu0 0
  %421 = vmatprep.subr.bf16.mxu0 0
  %422 = vmatpush1.bf16.msra.mxu0 0
  %423 = vmatprep.subr.bf16.mxu0 0
  %424 = vmatpush1.bf16.msra.mxu0 0
  %425 = vmatprep.subr.bf16.mxu0 0
  %426 = vmatpush1.bf16.msra.mxu0 0
  %427 = vmatprep.mubr.bf16.mxu0 0
  %428 = vmatmul.mubr.bf16.gmra.mrb[0].mxu0 %v393
  %v429 = vpop.f32.mrb[0].mxu0
  %v430 = vadd.f32 0.0, %v429
  %v431 = vpop.f32.mrb[0].mxu0
  %v432 = vpop.f32.mrb[0].mxu0
  %v433 = vpop.f32.mrb[0].mxu0
  %434 = vdwg.mxu0
  %v435 = vadd.f32 %v141, %v430
  %v436 = vxor.u32 %v435, 2147483648
  %v437 = vmul.f32 %v436, 1.442695
  %v438 = vpow.pop %v437
  %v439 = vadd.f32 %v438, 1.0
  %v440 = vrcp.pop %v439
  %v441 = vmul.f32 1.0, %v440
  %v442 = vmul.f32 %v441, 2.0
  %v443 = vsub.f32 %v442, 1.0
  %v444 = vmul.f32 %v441, %v381
  %446 = vrot.lane.b32.xlu0 %v443, 64
  %v447 = vpop.permute.xlu0 %446
  %v449 = vmul.f32 %v441, %v447
  %451 = vrot.lane.b32.xlu0 %v449, 32
  %v452 = vpop.permute.xlu0 %451
  %v454 = vadd.f32 %v444, %v452
  %v455 = vtanh.pop %v454
  %457 = vrot.lane.b32.xlu0 %v455, 64
  %v458 = vpop.permute.xlu0 %457
  %v460 = vmul.f32 %v441, %v458
  %v461 = vpack.c.bf16 %v460, %v460
  %463 = vrot.lane.b32.xlu0 %v461, 32
  %v464 = vpop.permute.xlu0 %463
  %v466 = vsel %vm172, %v464, 0
  %468 = vmatprep.subr.bf16.mxu0 0
  %469 = vmatpush1.bf16.msra.mxu0 %v168
  %470 = vmatprep.subr.bf16.mxu0 0
  %471 = vmatpush1.bf16.msra.mxu0 %v169
  %472 = vmatprep.subr.bf16.mxu0 0
  %473 = vmatpush1.bf16.msra.mxu0 0
  %474 = vmatprep.subr.bf16.mxu0 0
  %475 = vmatpush1.bf16.msra.mxu0 0
  %476 = vmatprep.subr.bf16.mxu0 0
  %477 = vmatpush1.bf16.msra.mxu0 0
  %478 = vmatprep.subr.bf16.mxu0 0
  %479 = vmatpush1.bf16.msra.mxu0 0
  %480 = vmatprep.subr.bf16.mxu0 0
  %481 = vmatpush1.bf16.msra.mxu0 0
  %482 = vmatprep.subr.bf16.mxu0 0
  %483 = vmatpush1.bf16.msra.mxu0 0
  %484 = vmatprep.subr.bf16.mxu0 0
  %485 = vmatpush1.bf16.msra.mxu0 0
  %486 = vmatprep.subr.bf16.mxu0 0
  %487 = vmatpush1.bf16.msra.mxu0 0
  %488 = vmatprep.subr.bf16.mxu0 0
  %489 = vmatpush1.bf16.msra.mxu0 0
  %490 = vmatprep.subr.bf16.mxu0 0
  %491 = vmatpush1.bf16.msra.mxu0 0
  %492 = vmatprep.subr.bf16.mxu0 0
  %493 = vmatpush1.bf16.msra.mxu0 0
  %494 = vmatprep.subr.bf16.mxu0 0
  %495 = vmatpush1.bf16.msra.mxu0 0
  %496 = vmatprep.subr.bf16.mxu0 0
  %497 = vmatpush1.bf16.msra.mxu0 0
  %498 = vmatprep.subr.bf16.mxu0 0
  %499 = vmatpush1.bf16.msra.mxu0 0
  %500 = vmatprep.mubr.bf16.mxu0 0
  %501 = vmatmul.mubr.bf16.gmra.mrb[0].mxu0 %v466
  %v502 = vpop.f32.mrb[0].mxu0
  %v503 = vadd.f32 0.0, %v502
  %v504 = vpop.f32.mrb[0].mxu0
  %v505 = vpop.f32.mrb[0].mxu0
  %v506 = vpop.f32.mrb[0].mxu0
  %507 = vdwg.mxu0
  %v508 = vadd.f32 %v146, %v503
  %v509 = vxor.u32 %v508, 2147483648
  %v510 = vmul.f32 %v509, 1.442695
  %v511 = vpow.pop %v510
  %v512 = vadd.f32 %v511, 1.0
  %v513 = vrcp.pop %v512
  %v514 = vmul.f32 1.0, %v513
  %v515 = vmul.f32 %v514, 2.0
  %v516 = vsub.f32 %v515, 1.0
  %v517 = vmul.f32 %v514, %v454
  %519 = vrot.lane.b32.xlu0 %v516, 64
  %v520 = vpop.permute.xlu0 %519
  %v522 = vmul.f32 %v514, %v520
  %524 = vrot.lane.b32.xlu0 %v522, 32
  %v525 = vpop.permute.xlu0 %524
  %v527 = vadd.f32 %v517, %v525
  %v528 = vtanh.pop %v527
  %530 = vrot.lane.b32.xlu0 %v528, 64
  %v531 = vpop.permute.xlu0 %530
  %v533 = vmul.f32 %v514, %v531
  %v534 = vpack.c.bf16 %v533, %v533
  %536 = vrot.lane.b32.xlu0 %v534, 32
  %v537 = vpop.permute.xlu0 %536
  %v539 = vsel %vm172, %v537, 0
  %541 = vmatprep.subr.bf16.mxu0 0
  %542 = vmatpush1.bf16.msra.mxu0 %v168
  %543 = vmatprep.subr.bf16.mxu0 0
  %544 = vmatpush1.bf16.msra.mxu0 %v169
  %545 = vmatprep.subr.bf16.mxu0 0
  %546 = vmatpush1.bf16.msra.mxu0 0
  %547 = vmatprep.subr.bf16.mxu0 0
  %548 = vmatpush1.bf16.msra.mxu0 0
  %549 = vmatprep.subr.bf16.mxu0 0
  %550 = vmatpush1.bf16.msra.mxu0 0
  %551 = vmatprep.subr.bf16.mxu0 0
  %552 = vmatpush1.bf16.msra.mxu0 0
  %553 = vmatprep.subr.bf16.mxu0 0
  %554 = vmatpush1.bf16.msra.mxu0 0
  %555 = vmatprep.subr.bf16.mxu0 0
  %556 = vmatpush1.bf16.msra.mxu0 0
  %557 = vmatprep.subr.bf16.mxu0 0
  %558 = vmatpush1.bf16.msra.mxu0 0
  %559 = vmatprep.subr.bf16.mxu0 0
  %560 = vmatpush1.bf16.msra.mxu0 0
  %561 = vmatprep.subr.bf16.mxu0 0
  %562 = vmatpush1.bf16.msra.mxu0 0
  %563 = vmatprep.subr.bf16.mxu0 0
  %564 = vmatpush1.bf16.msra.mxu0 0
  %565 = vmatprep.subr.bf16.mxu0 0
  %566 = vmatpush1.bf16.msra.mxu0 0
  %567 = vmatprep.subr.bf16.mxu0 0
  %568 = vmatpush1.bf16.msra.mxu0 0
  %569 = vmatprep.subr.bf16.mxu0 0
  %570 = vmatpush1.bf16.msra.mxu0 0
  %571 = vmatprep.subr.bf16.mxu0 0
  %572 = vmatpush1.bf16.msra.mxu0 0
  %573 = vmatprep.mubr.bf16.mxu0 0
  %574 = vmatmul.mubr.bf16.gmra.mrb[0].mxu0 %v539
  %v575 = vpop.f32.mrb[0].mxu0
  %v576 = vadd.f32 0.0, %v575
  %v577 = vpop.f32.mrb[0].mxu0
  %v578 = vpop.f32.mrb[0].mxu0
  %v579 = vpop.f32.mrb[0].mxu0
  %580 = vdwg.mxu0
  %v581 = vadd.f32 %v149, %v576
  %v582 = vxor.u32 %v581, 2147483648
  %v583 = vmul.f32 %v582, 1.442695
  %v584 = vpow.pop %v583
  %v585 = vadd.f32 %v584, 1.0
  %v586 = vrcp.pop %v585
  %v587 = vmul.f32 1.0, %v586
  %v588 = vmul.f32 %v587, 2.0
  %v589 = vsub.f32 %v588, 1.0
  %v590 = vmul.f32 %v587, %v527
  %592 = vrot.lane.b32.xlu0 %v589, 64
  %v593 = vpop.permute.xlu0 %592
  %v595 = vmul.f32 %v587, %v593
  %597 = vrot.lane.b32.xlu0 %v595, 32
  %v598 = vpop.permute.xlu0 %597
  %v600 = vadd.f32 %v590, %v598
  %v601 = vtanh.pop %v600
  %603 = vrot.lane.b32.xlu0 %v601, 64
  %v604 = vpop.permute.xlu0 %603
  %v606 = vmul.f32 %v587, %v604
  %v607 = vpack.c.bf16 %v606, %v606
  %609 = vrot.lane.b32.xlu0 %v607, 32
  %v610 = vpop.permute.xlu0 %609
  %v612 = vsel %vm172, %v610, 0
  %614 = vmatprep.subr.bf16.mxu0 0
  %615 = vmatpush1.bf16.msra.mxu0 %v168
  %616 = vmatprep.subr.bf16.mxu0 0
  %617 = vmatpush1.bf16.msra.mxu0 %v169
  %618 = vmatprep.subr.bf16.mxu0 0
  %619 = vmatpush1.bf16.msra.mxu0 0
  %620 = vmatprep.subr.bf16.mxu0 0
  %621 = vmatpush1.bf16.msra.mxu0 0
  %622 = vmatprep.subr.bf16.mxu0 0
  %623 = vmatpush1.bf16.msra.mxu0 0
  %624 = vmatprep.subr.bf16.mxu0 0
  %625 = vmatpush1.bf16.msra.mxu0 0
  %626 = vmatprep.subr.bf16.mxu0 0
  %627 = vmatpush1.bf16.msra.mxu0 0
  %628 = vmatprep.subr.bf16.mxu0 0
  %629 = vmatpush1.bf16.msra.mxu0 0
  %630 = vmatprep.subr.bf16.mxu0 0
  %631 = vmatpush1.bf16.msra.mxu0 0
  %632 = vmatprep.subr.bf16.mxu0 0
  %633 = vmatpush1.bf16.msra.mxu0 0
  %634 = vmatprep.subr.bf16.mxu0 0
  %635 = vmatpush1.bf16.msra.mxu0 0
  %636 = vmatprep.subr.bf16.mxu0 0
  %637 = vmatpush1.bf16.msra.mxu0 0
  %638 = vmatprep.subr.bf16.mxu0 0
  %639 = vmatpush1.bf16.msra.mxu0 0
  %640 = vmatprep.subr.bf16.mxu0 0
  %641 = vmatpush1.bf16.msra.mxu0 0
  %642 = vmatprep.subr.bf16.mxu0 0
  %643 = vmatpush1.bf16.msra.mxu0 0
  %644 = vmatprep.subr.bf16.mxu0 0
  %645 = vmatpush1.bf16.msra.mxu0 0
  %646 = vmatprep.mubr.bf16.mxu0 0
  %647 = vmatmul.mubr.bf16.gmra.mrb[0].mxu0 %v612
  %v648 = vpop.f32.mrb[0].mxu0
  %v649 = vadd.f32 0.0, %v648
  %v650 = vpop.f32.mrb[0].mxu0
  %v651 = vpop.f32.mrb[0].mxu0
  %v652 = vpop.f32.mrb[0].mxu0
  %653 = vdwg.mxu0
  %v654 = vadd.f32 %v154, %v649
  %v655 = vxor.u32 %v654, 2147483648
  %v656 = vmul.f32 %v655, 1.442695
  %v657 = vpow.pop %v656
  %v658 = vadd.f32 %v657, 1.0
  %v659 = vrcp.pop %v658
  %v660 = vmul.f32 1.0, %v659
  %v661 = vmul.f32 %v660, 2.0
  %v662 = vsub.f32 %v661, 1.0
  %v663 = vmul.f32 %v660, %v600
  %665 = vrot.lane.b32.xlu0 %v662, 64
  %v666 = vpop.permute.xlu0 %665
  %v668 = vmul.f32 %v660, %v666
  %670 = vrot.lane.b32.xlu0 %v668, 32
  %v671 = vpop.permute.xlu0 %670
  %v673 = vadd.f32 %v663, %v671
  %v674 = vtanh.pop %v673
  %676 = vrot.lane.b32.xlu0 %v674, 64
  %v677 = vpop.permute.xlu0 %676
  %v679 = vmul.f32 %v660, %v677
  %v680 = vpack.c.bf16 %v679, %v679
  %682 = vrot.lane.b32.xlu0 %v680, 32
  %v683 = vpop.permute.xlu0 %682
  %v685 = vsel %vm172, %v683, 0
  %687 = vmatprep.subr.bf16.mxu0 0
  %688 = vmatpush1.bf16.msra.mxu0 %v168
  %689 = vmatprep.subr.bf16.mxu0 0
  %690 = vmatpush1.bf16.msra.mxu0 %v169
  %691 = vmatprep.subr.bf16.mxu0 0
  %692 = vmatpush1.bf16.msra.mxu0 0
  %693 = vmatprep.subr.bf16.mxu0 0
  %694 = vmatpush1.bf16.msra.mxu0 0
  %695 = vmatprep.subr.bf16.mxu0 0
  %696 = vmatpush1.bf16.msra.mxu0 0
  %697 = vmatprep.subr.bf16.mxu0 0
  %698 = vmatpush1.bf16.msra.mxu0 0
  %699 = vmatprep.subr.bf16.mxu0 0
  %700 = vmatpush1.bf16.msra.mxu0 0
  %701 = vmatprep.subr.bf16.mxu0 0
  %702 = vmatpush1.bf16.msra.mxu0 0
  %703 = vmatprep.subr.bf16.mxu0 0
  %704 = vmatpush1.bf16.msra.mxu0 0
  %705 = vmatprep.subr.bf16.mxu0 0
  %706 = vmatpush1.bf16.msra.mxu0 0
  %707 = vmatprep.subr.bf16.mxu0 0
  %708 = vmatpush1.bf16.msra.mxu0 0
  %709 = vmatprep.subr.bf16.mxu0 0
  %710 = vmatpush1.bf16.msra.mxu0 0
  %711 = vmatprep.subr.bf16.mxu0 0
  %712 = vmatpush1.bf16.msra.mxu0 0
  %713 = vmatprep.subr.bf16.mxu0 0
  %714 = vmatpush1.bf16.msra.mxu0 0
  %715 = vmatprep.subr.bf16.mxu0 0
  %716 = vmatpush1.bf16.msra.mxu0 0
  %717 = vmatprep.subr.bf16.mxu0 0
  %718 = vmatpush1.bf16.msra.mxu0 0
  %719 = vmatprep.mubr.bf16.mxu0 0
  %720 = vmatmul.mubr.bf16.gmra.mrb[0].mxu0 %v685
  %v721 = vpop.f32.mrb[0].mxu0
  %v722 = vadd.f32 0.0, %v721
  %v723 = vpop.f32.mrb[0].mxu0
  %v724 = vpop.f32.mrb[0].mxu0
  %v725 = vpop.f32.mrb[0].mxu0
  %726 = vdwg.mxu0
  %v727 = vadd.f32 %v157, %v722
  %v728 = vxor.u32 %v727, 2147483648
  %v729 = vmul.f32 %v728, 1.442695
  %v730 = vpow.pop %v729
  %v731 = vadd.f32 %v730, 1.0
  %v732 = vrcp.pop %v731
  %v733 = vmul.f32 1.0, %v732
  %v734 = vmul.f32 %v733, 2.0
  %v735 = vsub.f32 %v734, 1.0
  %v736 = vmul.f32 %v733, %v673
  %738 = vrot.lane.b32.xlu0 %v735, 64
  %v739 = vpop.permute.xlu0 %738
  %v741 = vmul.f32 %v733, %v739
  %743 = vrot.lane.b32.xlu0 %v741, 32
  %v744 = vpop.permute.xlu0 %743
  %v746 = vadd.f32 %v736, %v744
  %v747 = vtanh.pop %v746
  %749 = vrot.lane.b32.xlu0 %v747, 64
  %v750 = vpop.permute.xlu0 %749
  %v752 = vmul.f32 %v733, %v750
  %v753 = vpack.c.bf16 %v314, %v241
  %v754 = vpack.c.bf16 %v460, %v387
  %v755 = vpack.c.bf16 %v606, %v533
  %v756 = vpack.c.bf16 %v752, %v679
  %v757 = vld [vmem:[%s4] sm:$0xf]
  %v758 = vld [vmem:[%s4 + $0x4] sm:$0xf]
  %v759 = vld [vmem:[%s4 + $0x8] sm:$0xf]
  %v760 = vld [vmem:[%s4 + $0xc] sm:$0xf]
  %v761 = vld [vmem:[%s5] sm:$0xf]
  %v762 = vld [vmem:[%s5 + $0x4] sm:$0xf]
  %v763 = vld [vmem:[%s5 + $0x8] sm:$0xf]
  %v764 = vld [vmem:[%s5 + $0xc] sm:$0xf]
  %v765 = vld [vmem:[%s6] sm:$0x1]
  %v767 = vlaneseq
  %v768 = vshrl.u32 %v767, 7
  %v769 = vsub.s32 0, %v768
  %v770 = vrot.slane %v765, %v769
  %776 = vrot.lane.b32.xlu0 %v753, 32
  %v777 = vpop.permute.xlu0 %776
  %778 = vrot.lane.b32.xlu0 %v754, 32
  %v779 = vpop.permute.xlu0 %778
  %780 = vrot.lane.b32.xlu0 %v755, 32
  %v781 = vpop.permute.xlu0 %780
  %782 = vrot.lane.b32.xlu0 %v756, 32
  %v783 = vpop.permute.xlu0 %782
  %v788 = vunpack.c.l.b16 %v757
  %v789 = vunpack.c.l.b16 %v758
  %v790 = vunpack.c.l.b16 %v759
  %v791 = vunpack.c.l.b16 %v760
  %v792 = vpack.c.b16 %v789, %v788
  %v793 = vpack.c.b16 %v791, %v790
  %v797 = vsel %vm172, %v777, 0
  %v800 = vsel %vm172, %v779, 0
  %v803 = vsel %vm172, %v781, 0
  %v806 = vsel %vm172, %v783, 0
  %808 = vmatprep.subr.bf16.mxu0 0
  %809 = vmatpush1.bf16.msra.mxu0 %v792
  %810 = vmatprep.subr.bf16.mxu0 0
  %811 = vmatpush1.bf16.msra.mxu0 %v793
  %812 = vmatprep.subr.bf16.mxu0 0
  %813 = vmatpush1.bf16.msra.mxu0 0
  %814 = vmatprep.subr.bf16.mxu0 0
  %815 = vmatpush1.bf16.msra.mxu0 0
  %816 = vmatprep.subr.bf16.mxu0 0
  %817 = vmatpush1.bf16.msra.mxu0 0
  %818 = vmatprep.subr.bf16.mxu0 0
  %819 = vmatpush1.bf16.msra.mxu0 0
  %820 = vmatprep.subr.bf16.mxu0 0
  %821 = vmatpush1.bf16.msra.mxu0 0
  %822 = vmatprep.subr.bf16.mxu0 0
  %823 = vmatpush1.bf16.msra.mxu0 0
  %824 = vmatprep.subr.bf16.mxu0 0
  %825 = vmatpush1.bf16.msra.mxu0 0
  %826 = vmatprep.subr.bf16.mxu0 0
  %827 = vmatpush1.bf16.msra.mxu0 0
  %828 = vmatprep.subr.bf16.mxu0 0
  %829 = vmatpush1.bf16.msra.mxu0 0
  %830 = vmatprep.subr.bf16.mxu0 0
  %831 = vmatpush1.bf16.msra.mxu0 0
  %832 = vmatprep.subr.bf16.mxu0 0
  %833 = vmatpush1.bf16.msra.mxu0 0
  %834 = vmatprep.subr.bf16.mxu0 0
  %835 = vmatpush1.bf16.msra.mxu0 0
  %836 = vmatprep.subr.bf16.mxu0 0
  %837 = vmatpush1.bf16.msra.mxu0 0
  %838 = vmatprep.subr.bf16.mxu0 0
  %839 = vmatpush1.bf16.msra.mxu0 0
  %840 = vmatprep.mubr.bf16.mxu0 0
  %841 = vmatmul.mubr.bf16.gmra.mrb[0].mxu0 %v797
  %v842 = vpop.f32.mrb[0].mxu0
  %v843 = vadd.f32 %v770, %v842
  %v844 = vpop.f32.mrb[0].mxu0
  %v845 = vpop.f32.mrb[0].mxu0
  %v846 = vadd.f32 %v770, %v845
  %v847 = vpop.f32.mrb[0].mxu0
  %848 = vmatprep.mubr.bf16.mxu0 0
  %849 = vmatmul.mubr.bf16.gmra.mrb[0].mxu0 %v800
  %v850 = vpop.f32.mrb[0].mxu0
  %v851 = vadd.f32 %v770, %v850
  %v852 = vpop.f32.mrb[0].mxu0
  %v853 = vpop.f32.mrb[0].mxu0
  %v854 = vadd.f32 %v770, %v853
  %v855 = vpop.f32.mrb[0].mxu0
  %856 = vmatprep.mubr.bf16.mxu0 0
  %857 = vmatmul.mubr.bf16.gmra.mrb[0].mxu0 %v803
  %v858 = vpop.f32.mrb[0].mxu0
  %v859 = vadd.f32 %v770, %v858
  %v860 = vpop.f32.mrb[0].mxu0
  %v861 = vpop.f32.mrb[0].mxu0
  %v862 = vadd.f32 %v770, %v861
  %v863 = vpop.f32.mrb[0].mxu0
  %864 = vmatprep.mubr.bf16.mxu0 0
  %865 = vmatmul.mubr.bf16.gmra.mrb[0].mxu0 %v806
  %v866 = vpop.f32.mrb[0].mxu0
  %v867 = vadd.f32 %v770, %v866
  %v868 = vpop.f32.mrb[0].mxu0
  %v869 = vpop.f32.mrb[0].mxu0
  %v870 = vadd.f32 %v770, %v869
  %v871 = vpop.f32.mrb[0].mxu0
  %872 = vdwg.mxu0
  %v877 = vunpack.c.l.b16 %v761
  %v878 = vunpack.c.l.b16 %v762
  %v879 = vunpack.c.l.b16 %v763
  %v880 = vunpack.c.l.b16 %v764
  %v881 = vpack.c.b16 %v878, %v877
  %v882 = vpack.c.b16 %v880, %v879
  %885 = vmatprep.subr.bf16.mxu0 0
  %886 = vmatpush1.bf16.msra.mxu0 %v881
  %887 = vmatprep.subr.bf16.mxu0 0
  %888 = vmatpush1.bf16.msra.mxu0 %v882
  %889 = vmatprep.subr.bf16.mxu0 0
  %890 = vmatpush1.bf16.msra.mxu0 0
  %891 = vmatprep.subr.bf16.mxu0 0
  %892 = vmatpush1.bf16.msra.mxu0 0
  %893 = vmatprep.subr.bf16.mxu0 0
  %894 = vmatpush1.bf16.msra.mxu0 0
  %895 = vmatprep.subr.bf16.mxu0 0
  %896 = vmatpush1.bf16.msra.mxu0 0
  %897 = vmatprep.subr.bf16.mxu0 0
  %898 = vmatpush1.bf16.msra.mxu0 0
  %899 = vmatprep.subr.bf16.mxu0 0
  %900 = vmatpush1.bf16.msra.mxu0 0
  %901 = vmatprep.subr.bf16.mxu0 0
  %902 = vmatpush1.bf16.msra.mxu0 0
  %903 = vmatprep.subr.bf16.mxu0 0
  %904 = vmatpush1.bf16.msra.mxu0 0
  %905 = vmatprep.subr.bf16.mxu0 0
  %906 = vmatpush1.bf16.msra.mxu0 0
  %907 = vmatprep.subr.bf16.mxu0 0
  %908 = vmatpush1.bf16.msra.mxu0 0
  %909 = vmatprep.subr.bf16.mxu0 0
  %910 = vmatpush1.bf16.msra.mxu0 0
  %911 = vmatprep.subr.bf16.mxu0 0
  %912 = vmatpush1.bf16.msra.mxu0 0
  %913 = vmatprep.subr.bf16.mxu0 0
  %914 = vmatpush1.bf16.msra.mxu0 0
  %915 = vmatprep.subr.bf16.mxu0 0
  %916 = vmatpush1.bf16.msra.mxu0 0
  %917 = vmatprep.mubr.bf16.mxu0 0
  %918 = vmatmul.mubr.bf16.gmra.mrb[0].mxu0 %v174
  %v919 = vpop.f32.mrb[0].mxu0
  %v920 = vadd.f32 0.0, %v919
  %v921 = vpop.f32.mrb[0].mxu0
  %v922 = vpop.f32.mrb[0].mxu0
  %v923 = vpop.f32.mrb[0].mxu0
  %924 = vdwg.mxu0
  %v925 = vadd.f32 %v843, %v920
  %v926 = vxor.u32 %v925, 2147483648
  %v927 = vmul.f32 %v926, 1.442695
  %v928 = vpow.pop %v927
  %v929 = vadd.f32 %v928, 1.0
  %v930 = vrcp.pop %v929
  %v931 = vmul.f32 1.0, %v930
  %v932 = vmul.f32 %v931, 2.0
  %v933 = vsub.f32 %v932, 1.0
  %v934 = vmul.f32 %v931, 0.0
  %936 = vrot.lane.b32.xlu0 %v933, 64
  %v937 = vpop.permute.xlu0 %936
  %v939 = vmul.f32 %v931, %v937
  %941 = vrot.lane.b32.xlu0 %v939, 32
  %v942 = vpop.permute.xlu0 %941
  %v944 = vadd.f32 %v934, %v942
  %v945 = vtanh.pop %v944
  %947 = vrot.lane.b32.xlu0 %v945, 64
  %v948 = vpop.permute.xlu0 %947
  %v950 = vmul.f32 %v931, %v948
  %v951 = vpack.c.bf16 %v950, %v950
  %953 = vrot.lane.b32.xlu0 %v951, 32
  %v954 = vpop.permute.xlu0 %953
  %v956 = vsel %vm172, %v954, 0
  %958 = vmatprep.subr.bf16.mxu0 0
  %959 = vmatpush1.bf16.msra.mxu0 %v881
  %960 = vmatprep.subr.bf16.mxu0 0
  %961 = vmatpush1.bf16.msra.mxu0 %v882
  %962 = vmatprep.subr.bf16.mxu0 0
  %963 = vmatpush1.bf16.msra.mxu0 0
  %964 = vmatprep.subr.bf16.mxu0 0
  %965 = vmatpush1.bf16.msra.mxu0 0
  %966 = vmatprep.subr.bf16.mxu0 0
  %967 = vmatpush1.bf16.msra.mxu0 0
  %968 = vmatprep.subr.bf16.mxu0 0
  %969 = vmatpush1.bf16.msra.mxu0 0
  %970 = vmatprep.subr.bf16.mxu0 0
  %971 = vmatpush1.bf16.msra.mxu0 0
  %972 = vmatprep.subr.bf16.mxu0 0
  %973 = vmatpush1.bf16.msra.mxu0 0
  %974 = vmatprep.subr.bf16.mxu0 0
  %975 = vmatpush1.bf16.msra.mxu0 0
  %976 = vmatprep.subr.bf16.mxu0 0
  %977 = vmatpush1.bf16.msra.mxu0 0
  %978 = vmatprep.subr.bf16.mxu0 0
  %979 = vmatpush1.bf16.msra.mxu0 0
  %980 = vmatprep.subr.bf16.mxu0 0
  %981 = vmatpush1.bf16.msra.mxu0 0
  %982 = vmatprep.subr.bf16.mxu0 0
  %983 = vmatpush1.bf16.msra.mxu0 0
  %984 = vmatprep.subr.bf16.mxu0 0
  %985 = vmatpush1.bf16.msra.mxu0 0
  %986 = vmatprep.subr.bf16.mxu0 0
  %987 = vmatpush1.bf16.msra.mxu0 0
  %988 = vmatprep.subr.bf16.mxu0 0
  %989 = vmatpush1.bf16.msra.mxu0 0
  %990 = vmatprep.mubr.bf16.mxu0 0
  %991 = vmatmul.mubr.bf16.gmra.mrb[0].mxu0 %v956
  %v992 = vpop.f32.mrb[0].mxu0
  %v993 = vadd.f32 0.0, %v992
  %v994 = vpop.f32.mrb[0].mxu0
  %v995 = vpop.f32.mrb[0].mxu0
  %v996 = vpop.f32.mrb[0].mxu0
  %997 = vdwg.mxu0
  %v998 = vadd.f32 %v846, %v993
  %v999 = vxor.u32 %v998, 2147483648
  %v1000 = vmul.f32 %v999, 1.442695
  %v1001 = vpow.pop %v1000
  %v1002 = vadd.f32 %v1001, 1.0
  %v1003 = vrcp.pop %v1002
  %v1004 = vmul.f32 1.0, %v1003
  %v1005 = vmul.f32 %v1004, 2.0
  %v1006 = vsub.f32 %v1005, 1.0
  %v1007 = vmul.f32 %v1004, %v944
  %1009 = vrot.lane.b32.xlu0 %v1006, 64
  %v1010 = vpop.permute.xlu0 %1009
  %v1012 = vmul.f32 %v1004, %v1010
  %1014 = vrot.lane.b32.xlu0 %v1012, 32
  %v1015 = vpop.permute.xlu0 %1014
  %v1017 = vadd.f32 %v1007, %v1015
  %v1018 = vtanh.pop %v1017
  %1020 = vrot.lane.b32.xlu0 %v1018, 64
  %v1021 = vpop.permute.xlu0 %1020
  %v1023 = vmul.f32 %v1004, %v1021
  %v1024 = vpack.c.bf16 %v1023, %v1023
  %1026 = vrot.lane.b32.xlu0 %v1024, 32
  %v1027 = vpop.permute.xlu0 %1026
  %v1029 = vsel %vm172, %v1027, 0
  %1031 = vmatprep.subr.bf16.mxu0 0
  %1032 = vmatpush1.bf16.msra.mxu0 %v881
  %1033 = vmatprep.subr.bf16.mxu0 0
  %1034 = vmatpush1.bf16.msra.mxu0 %v882
  %1035 = vmatprep.subr.bf16.mxu0 0
  %1036 = vmatpush1.bf16.msra.mxu0 0
  %1037 = vmatprep.subr.bf16.mxu0 0
  %1038 = vmatpush1.bf16.msra.mxu0 0
  %1039 = vmatprep.subr.bf16.mxu0 0
  %1040 = vmatpush1.bf16.msra.mxu0 0
  %1041 = vmatprep.subr.bf16.mxu0 0
  %1042 = vmatpush1.bf16.msra.mxu0 0
  %1043 = vmatprep.subr.bf16.mxu0 0
  %1044 = vmatpush1.bf16.msra.mxu0 0
  %1045 = vmatprep.subr.bf16.mxu0 0
  %1046 = vmatpush1.bf16.msra.mxu0 0
  %1047 = vmatprep.subr.bf16.mxu0 0
  %1048 = vmatpush1.bf16.msra.mxu0 0
  %1049 = vmatprep.subr.bf16.mxu0 0
  %1050 = vmatpush1.bf16.msra.mxu0 0
  %1051 = vmatprep.subr.bf16.mxu0 0
  %1052 = vmatpush1.bf16.msra.mxu0 0
  %1053 = vmatprep.subr.bf16.mxu0 0
  %1054 = vmatpush1.bf16.msra.mxu0 0
  %1055 = vmatprep.subr.bf16.mxu0 0
  %1056 = vmatpush1.bf16.msra.mxu0 0
  %1057 = vmatprep.subr.bf16.mxu0 0
  %1058 = vmatpush1.bf16.msra.mxu0 0
  %1059 = vmatprep.subr.bf16.mxu0 0
  %1060 = vmatpush1.bf16.msra.mxu0 0
  %1061 = vmatprep.subr.bf16.mxu0 0
  %1062 = vmatpush1.bf16.msra.mxu0 0
  %1063 = vmatprep.mubr.bf16.mxu0 0
  %1064 = vmatmul.mubr.bf16.gmra.mrb[0].mxu0 %v1029
  %v1065 = vpop.f32.mrb[0].mxu0
  %v1066 = vadd.f32 0.0, %v1065
  %v1067 = vpop.f32.mrb[0].mxu0
  %v1068 = vpop.f32.mrb[0].mxu0
  %v1069 = vpop.f32.mrb[0].mxu0
  %1070 = vdwg.mxu0
  %v1071 = vadd.f32 %v851, %v1066
  %v1072 = vxor.u32 %v1071, 2147483648
  %v1073 = vmul.f32 %v1072, 1.442695
  %v1074 = vpow.pop %v1073
  %v1075 = vadd.f32 %v1074, 1.0
  %v1076 = vrcp.pop %v1075
  %v1077 = vmul.f32 1.0, %v1076
  %v1078 = vmul.f32 %v1077, 2.0
  %v1079 = vsub.f32 %v1078, 1.0
  %v1080 = vmul.f32 %v1077, %v1017
  %1082 = vrot.lane.b32.xlu0 %v1079, 64
  %v1083 = vpop.permute.xlu0 %1082
  %v1085 = vmul.f32 %v1077, %v1083
  %1087 = vrot.lane.b32.xlu0 %v1085, 32
  %v1088 = vpop.permute.xlu0 %1087
  %v1090 = vadd.f32 %v1080, %v1088
  %v1091 = vtanh.pop %v1090
  %1093 = vrot.lane.b32.xlu0 %v1091, 64
  %v1094 = vpop.permute.xlu0 %1093
  %v1096 = vmul.f32 %v1077, %v1094
  %v1097 = vpack.c.bf16 %v1096, %v1096
  %1099 = vrot.lane.b32.xlu0 %v1097, 32
  %v1100 = vpop.permute.xlu0 %1099
  %v1102 = vsel %vm172, %v1100, 0
  %1104 = vmatprep.subr.bf16.mxu0 0
  %1105 = vmatpush1.bf16.msra.mxu0 %v881
  %1106 = vmatprep.subr.bf16.mxu0 0
  %1107 = vmatpush1.bf16.msra.mxu0 %v882
  %1108 = vmatprep.subr.bf16.mxu0 0
  %1109 = vmatpush1.bf16.msra.mxu0 0
  %1110 = vmatprep.subr.bf16.mxu0 0
  %1111 = vmatpush1.bf16.msra.mxu0 0
  %1112 = vmatprep.subr.bf16.mxu0 0
  %1113 = vmatpush1.bf16.msra.mxu0 0
  %1114 = vmatprep.subr.bf16.mxu0 0
  %1115 = vmatpush1.bf16.msra.mxu0 0
  %1116 = vmatprep.subr.bf16.mxu0 0
  %1117 = vmatpush1.bf16.msra.mxu0 0
  %1118 = vmatprep.subr.bf16.mxu0 0
  %1119 = vmatpush1.bf16.msra.mxu0 0
  %1120 = vmatprep.subr.bf16.mxu0 0
  %1121 = vmatpush1.bf16.msra.mxu0 0
  %1122 = vmatprep.subr.bf16.mxu0 0
  %1123 = vmatpush1.bf16.msra.mxu0 0
  %1124 = vmatprep.subr.bf16.mxu0 0
  %1125 = vmatpush1.bf16.msra.mxu0 0
  %1126 = vmatprep.subr.bf16.mxu0 0
  %1127 = vmatpush1.bf16.msra.mxu0 0
  %1128 = vmatprep.subr.bf16.mxu0 0
  %1129 = vmatpush1.bf16.msra.mxu0 0
  %1130 = vmatprep.subr.bf16.mxu0 0
  %1131 = vmatpush1.bf16.msra.mxu0 0
  %1132 = vmatprep.subr.bf16.mxu0 0
  %1133 = vmatpush1.bf16.msra.mxu0 0
  %1134 = vmatprep.subr.bf16.mxu0 0
  %1135 = vmatpush1.bf16.msra.mxu0 0
  %1136 = vmatprep.mubr.bf16.mxu0 0
  %1137 = vmatmul.mubr.bf16.gmra.mrb[0].mxu0 %v1102
  %v1138 = vpop.f32.mrb[0].mxu0
  %v1139 = vadd.f32 0.0, %v1138
  %v1140 = vpop.f32.mrb[0].mxu0
  %v1141 = vpop.f32.mrb[0].mxu0
  %v1142 = vpop.f32.mrb[0].mxu0
  %1143 = vdwg.mxu0
  %v1144 = vadd.f32 %v854, %v1139
  %v1145 = vxor.u32 %v1144, 2147483648
  %v1146 = vmul.f32 %v1145, 1.442695
  %v1147 = vpow.pop %v1146
  %v1148 = vadd.f32 %v1147, 1.0
  %v1149 = vrcp.pop %v1148
  %v1150 = vmul.f32 1.0, %v1149
  %v1151 = vmul.f32 %v1150, 2.0
  %v1152 = vsub.f32 %v1151, 1.0
  %v1153 = vmul.f32 %v1150, %v1090
  %1155 = vrot.lane.b32.xlu0 %v1152, 64
  %v1156 = vpop.permute.xlu0 %1155
  %v1158 = vmul.f32 %v1150, %v1156
  %1160 = vrot.lane.b32.xlu0 %v1158, 32
  %v1161 = vpop.permute.xlu0 %1160
  %v1163 = vadd.f32 %v1153, %v1161
  %v1164 = vtanh.pop %v1163
  %1166 = vrot.lane.b32.xlu0 %v1164, 64
  %v1167 = vpop.permute.xlu0 %1166
  %v1169 = vmul.f32 %v1150, %v1167
  %v1170 = vpack.c.bf16 %v1169, %v1169
  %1172 = vrot.lane.b32.xlu0 %v1170, 32
  %v1173 = vpop.permute.xlu0 %1172
  %v1175 = vsel %vm172, %v1173, 0
  %1177 = vmatprep.subr.bf16.mxu0 0
  %1178 = vmatpush1.bf16.msra.mxu0 %v881
  %1179 = vmatprep.subr.bf16.mxu0 0
  %1180 = vmatpush1.bf16.msra.mxu0 %v882
  %1181 = vmatprep.subr.bf16.mxu0 0
  %1182 = vmatpush1.bf16.msra.mxu0 0
  %1183 = vmatprep.subr.bf16.mxu0 0
  %1184 = vmatpush1.bf16.msra.mxu0 0
  %1185 = vmatprep.subr.bf16.mxu0 0
  %1186 = vmatpush1.bf16.msra.mxu0 0
  %1187 = vmatprep.subr.bf16.mxu0 0
  %1188 = vmatpush1.bf16.msra.mxu0 0
  %1189 = vmatprep.subr.bf16.mxu0 0
  %1190 = vmatpush1.bf16.msra.mxu0 0
  %1191 = vmatprep.subr.bf16.mxu0 0
  %1192 = vmatpush1.bf16.msra.mxu0 0
  %1193 = vmatprep.subr.bf16.mxu0 0
  %1194 = vmatpush1.bf16.msra.mxu0 0
  %1195 = vmatprep.subr.bf16.mxu0 0
  %1196 = vmatpush1.bf16.msra.mxu0 0
  %1197 = vmatprep.subr.bf16.mxu0 0
  %1198 = vmatpush1.bf16.msra.mxu0 0
  %1199 = vmatprep.subr.bf16.mxu0 0
  %1200 = vmatpush1.bf16.msra.mxu0 0
  %1201 = vmatprep.subr.bf16.mxu0 0
  %1202 = vmatpush1.bf16.msra.mxu0 0
  %1203 = vmatprep.subr.bf16.mxu0 0
  %1204 = vmatpush1.bf16.msra.mxu0 0
  %1205 = vmatprep.subr.bf16.mxu0 0
  %1206 = vmatpush1.bf16.msra.mxu0 0
  %1207 = vmatprep.subr.bf16.mxu0 0
  %1208 = vmatpush1.bf16.msra.mxu0 0
  %1209 = vmatprep.mubr.bf16.mxu0 0
  %1210 = vmatmul.mubr.bf16.gmra.mrb[0].mxu0 %v1175
  %v1211 = vpop.f32.mrb[0].mxu0
  %v1212 = vadd.f32 0.0, %v1211
  %v1213 = vpop.f32.mrb[0].mxu0
  %v1214 = vpop.f32.mrb[0].mxu0
  %v1215 = vpop.f32.mrb[0].mxu0
  %1216 = vdwg.mxu0
  %v1217 = vadd.f32 %v859, %v1212
  %v1218 = vxor.u32 %v1217, 2147483648
  %v1219 = vmul.f32 %v1218, 1.442695
  %v1220 = vpow.pop %v1219
  %v1221 = vadd.f32 %v1220, 1.0
  %v1222 = vrcp.pop %v1221
  %v1223 = vmul.f32 1.0, %v1222
  %v1224 = vmul.f32 %v1223, 2.0
  %v1225 = vsub.f32 %v1224, 1.0
  %v1226 = vmul.f32 %v1223, %v1163
  %1228 = vrot.lane.b32.xlu0 %v1225, 64
  %v1229 = vpop.permute.xlu0 %1228
  %v1231 = vmul.f32 %v1223, %v1229
  %1233 = vrot.lane.b32.xlu0 %v1231, 32
  %v1234 = vpop.permute.xlu0 %1233
  %v1236 = vadd.f32 %v1226, %v1234
  %v1237 = vtanh.pop %v1236
  %1239 = vrot.lane.b32.xlu0 %v1237, 64
  %v1240 = vpop.permute.xlu0 %1239
  %v1242 = vmul.f32 %v1223, %v1240
  %v1243 = vpack.c.bf16 %v1242, %v1242
  %1245 = vrot.lane.b32.xlu0 %v1243, 32
  %v1246 = vpop.permute.xlu0 %1245
  %v1248 = vsel %vm172, %v1246, 0
  %1250 = vmatprep.subr.bf16.mxu0 0
  %1251 = vmatpush1.bf16.msra.mxu0 %v881
  %1252 = vmatprep.subr.bf16.mxu0 0
  %1253 = vmatpush1.bf16.msra.mxu0 %v882
  %1254 = vmatprep.subr.bf16.mxu0 0
  %1255 = vmatpush1.bf16.msra.mxu0 0
  %1256 = vmatprep.subr.bf16.mxu0 0
  %1257 = vmatpush1.bf16.msra.mxu0 0
  %1258 = vmatprep.subr.bf16.mxu0 0
  %1259 = vmatpush1.bf16.msra.mxu0 0
  %1260 = vmatprep.subr.bf16.mxu0 0
  %1261 = vmatpush1.bf16.msra.mxu0 0
  %1262 = vmatprep.subr.bf16.mxu0 0
  %1263 = vmatpush1.bf16.msra.mxu0 0
  %1264 = vmatprep.subr.bf16.mxu0 0
  %1265 = vmatpush1.bf16.msra.mxu0 0
  %1266 = vmatprep.subr.bf16.mxu0 0
  %1267 = vmatpush1.bf16.msra.mxu0 0
  %1268 = vmatprep.subr.bf16.mxu0 0
  %1269 = vmatpush1.bf16.msra.mxu0 0
  %1270 = vmatprep.subr.bf16.mxu0 0
  %1271 = vmatpush1.bf16.msra.mxu0 0
  %1272 = vmatprep.subr.bf16.mxu0 0
  %1273 = vmatpush1.bf16.msra.mxu0 0
  %1274 = vmatprep.subr.bf16.mxu0 0
  %1275 = vmatpush1.bf16.msra.mxu0 0
  %1276 = vmatprep.subr.bf16.mxu0 0
  %1277 = vmatpush1.bf16.msra.mxu0 0
  %1278 = vmatprep.subr.bf16.mxu0 0
  %1279 = vmatpush1.bf16.msra.mxu0 0
  %1280 = vmatprep.subr.bf16.mxu0 0
  %1281 = vmatpush1.bf16.msra.mxu0 0
  %1282 = vmatprep.mubr.bf16.mxu0 0
  %1283 = vmatmul.mubr.bf16.gmra.mrb[0].mxu0 %v1248
  %v1284 = vpop.f32.mrb[0].mxu0
  %v1285 = vadd.f32 0.0, %v1284
  %v1286 = vpop.f32.mrb[0].mxu0
  %v1287 = vpop.f32.mrb[0].mxu0
  %v1288 = vpop.f32.mrb[0].mxu0
  %1289 = vdwg.mxu0
  %v1290 = vadd.f32 %v862, %v1285
  %v1291 = vxor.u32 %v1290, 2147483648
  %v1292 = vmul.f32 %v1291, 1.442695
  %v1293 = vpow.pop %v1292
  %v1294 = vadd.f32 %v1293, 1.0
  %v1295 = vrcp.pop %v1294
  %v1296 = vmul.f32 1.0, %v1295
  %v1297 = vmul.f32 %v1296, 2.0
  %v1298 = vsub.f32 %v1297, 1.0
  %v1299 = vmul.f32 %v1296, %v1236
  %1301 = vrot.lane.b32.xlu0 %v1298, 64
  %v1302 = vpop.permute.xlu0 %1301
  %v1304 = vmul.f32 %v1296, %v1302
  %1306 = vrot.lane.b32.xlu0 %v1304, 32
  %v1307 = vpop.permute.xlu0 %1306
  %v1309 = vadd.f32 %v1299, %v1307
  %v1310 = vtanh.pop %v1309
  %1312 = vrot.lane.b32.xlu0 %v1310, 64
  %v1313 = vpop.permute.xlu0 %1312
  %v1315 = vmul.f32 %v1296, %v1313
  %v1316 = vpack.c.bf16 %v1315, %v1315
  %1318 = vrot.lane.b32.xlu0 %v1316, 32
  %v1319 = vpop.permute.xlu0 %1318
  %v1321 = vsel %vm172, %v1319, 0
  %1323 = vmatprep.subr.bf16.mxu0 0
  %1324 = vmatpush1.bf16.msra.mxu0 %v881
  %1325 = vmatprep.subr.bf16.mxu0 0
  %1326 = vmatpush1.bf16.msra.mxu0 %v882
  %1327 = vmatprep.subr.bf16.mxu0 0
  %1328 = vmatpush1.bf16.msra.mxu0 0
  %1329 = vmatprep.subr.bf16.mxu0 0
  %1330 = vmatpush1.bf16.msra.mxu0 0
  %1331 = vmatprep.subr.bf16.mxu0 0
  %1332 = vmatpush1.bf16.msra.mxu0 0
  %1333 = vmatprep.subr.bf16.mxu0 0
  %1334 = vmatpush1.bf16.msra.mxu0 0
  %1335 = vmatprep.subr.bf16.mxu0 0
  %1336 = vmatpush1.bf16.msra.mxu0 0
  %1337 = vmatprep.subr.bf16.mxu0 0
  %1338 = vmatpush1.bf16.msra.mxu0 0
  %1339 = vmatprep.subr.bf16.mxu0 0
  %1340 = vmatpush1.bf16.msra.mxu0 0
  %1341 = vmatprep.subr.bf16.mxu0 0
  %1342 = vmatpush1.bf16.msra.mxu0 0
  %1343 = vmatprep.subr.bf16.mxu0 0
  %1344 = vmatpush1.bf16.msra.mxu0 0
  %1345 = vmatprep.subr.bf16.mxu0 0
  %1346 = vmatpush1.bf16.msra.mxu0 0
  %1347 = vmatprep.subr.bf16.mxu0 0
  %1348 = vmatpush1.bf16.msra.mxu0 0
  %1349 = vmatprep.subr.bf16.mxu0 0
  %1350 = vmatpush1.bf16.msra.mxu0 0
  %1351 = vmatprep.subr.bf16.mxu0 0
  %1352 = vmatpush1.bf16.msra.mxu0 0
  %1353 = vmatprep.subr.bf16.mxu0 0
  %1354 = vmatpush1.bf16.msra.mxu0 0
  %1355 = vmatprep.mubr.bf16.mxu0 0
  %1356 = vmatmul.mubr.bf16.gmra.mrb[0].mxu0 %v1321
  %v1357 = vpop.f32.mrb[0].mxu0
  %v1358 = vadd.f32 0.0, %v1357
  %v1359 = vpop.f32.mrb[0].mxu0
  %v1360 = vpop.f32.mrb[0].mxu0
  %v1361 = vpop.f32.mrb[0].mxu0
  %1362 = vdwg.mxu0
  %v1363 = vadd.f32 %v867, %v1358
  %v1364 = vxor.u32 %v1363, 2147483648
  %v1365 = vmul.f32 %v1364, 1.442695
  %v1366 = vpow.pop %v1365
  %v1367 = vadd.f32 %v1366, 1.0
  %v1368 = vrcp.pop %v1367
  %v1369 = vmul.f32 1.0, %v1368
  %v1370 = vmul.f32 %v1369, 2.0
  %v1371 = vsub.f32 %v1370, 1.0
  %v1372 = vmul.f32 %v1369, %v1309
  %1374 = vrot.lane.b32.xlu0 %v1371, 64
  %v1375 = vpop.permute.xlu0 %1374
  %v1377 = vmul.f32 %v1369, %v1375
  %1379 = vrot.lane.b32.xlu0 %v1377, 32
  %v1380 = vpop.permute.xlu0 %1379
  %v1382 = vadd.f32 %v1372, %v1380
  %v1383 = vtanh.pop %v1382
  %1385 = vrot.lane.b32.xlu0 %v1383, 64
  %v1386 = vpop.permute.xlu0 %1385
  %v1388 = vmul.f32 %v1369, %v1386
  %v1389 = vpack.c.bf16 %v1388, %v1388
  %1391 = vrot.lane.b32.xlu0 %v1389, 32
  %v1392 = vpop.permute.xlu0 %1391
  %v1394 = vsel %vm172, %v1392, 0
  %1396 = vmatprep.subr.bf16.mxu0 0
  %1397 = vmatpush1.bf16.msra.mxu0 %v881
  %1398 = vmatprep.subr.bf16.mxu0 0
  %1399 = vmatpush1.bf16.msra.mxu0 %v882
  %1400 = vmatprep.subr.bf16.mxu0 0
  %1401 = vmatpush1.bf16.msra.mxu0 0
  %1402 = vmatprep.subr.bf16.mxu0 0
  %1403 = vmatpush1.bf16.msra.mxu0 0
  %1404 = vmatprep.subr.bf16.mxu0 0
  %1405 = vmatpush1.bf16.msra.mxu0 0
  %1406 = vmatprep.subr.bf16.mxu0 0
  %1407 = vmatpush1.bf16.msra.mxu0 0
  %1408 = vmatprep.subr.bf16.mxu0 0
  %1409 = vmatpush1.bf16.msra.mxu0 0
  %1410 = vmatprep.subr.bf16.mxu0 0
  %1411 = vmatpush1.bf16.msra.mxu0 0
  %1412 = vmatprep.subr.bf16.mxu0 0
  %1413 = vmatpush1.bf16.msra.mxu0 0
  %1414 = vmatprep.subr.bf16.mxu0 0
  %1415 = vmatpush1.bf16.msra.mxu0 0
  %1416 = vmatprep.subr.bf16.mxu0 0
  %1417 = vmatpush1.bf16.msra.mxu0 0
  %1418 = vmatprep.subr.bf16.mxu0 0
  %1419 = vmatpush1.bf16.msra.mxu0 0
  %1420 = vmatprep.subr.bf16.mxu0 0
  %1421 = vmatpush1.bf16.msra.mxu0 0
  %1422 = vmatprep.subr.bf16.mxu0 0
  %1423 = vmatpush1.bf16.msra.mxu0 0
  %1424 = vmatprep.subr.bf16.mxu0 0
  %1425 = vmatpush1.bf16.msra.mxu0 0
  %1426 = vmatprep.subr.bf16.mxu0 0
  %1427 = vmatpush1.bf16.msra.mxu0 0
  %1428 = vmatprep.mubr.bf16.mxu0 0
  %1429 = vmatmul.mubr.bf16.gmra.mrb[0].mxu0 %v1394
  %v1430 = vpop.f32.mrb[0].mxu0
  %v1431 = vadd.f32 0.0, %v1430
  %v1432 = vpop.f32.mrb[0].mxu0
  %v1433 = vpop.f32.mrb[0].mxu0
  %v1434 = vpop.f32.mrb[0].mxu0
  %1435 = vdwg.mxu0
  %v1436 = vadd.f32 %v870, %v1431
  %v1437 = vxor.u32 %v1436, 2147483648
  %v1438 = vmul.f32 %v1437, 1.442695
  %v1439 = vpow.pop %v1438
  %v1440 = vadd.f32 %v1439, 1.0
  %v1441 = vrcp.pop %v1440
  %v1442 = vmul.f32 1.0, %v1441
  %v1443 = vmul.f32 %v1442, 2.0
  %v1444 = vsub.f32 %v1443, 1.0
  %v1445 = vmul.f32 %v1442, %v1382
  %1447 = vrot.lane.b32.xlu0 %v1444, 64
  %v1448 = vpop.permute.xlu0 %1447
  %v1450 = vmul.f32 %v1442, %v1448
  %1452 = vrot.lane.b32.xlu0 %v1450, 32
  %v1453 = vpop.permute.xlu0 %1452
  %v1455 = vadd.f32 %v1445, %v1453
  %v1456 = vtanh.pop %v1455
  %1458 = vrot.lane.b32.xlu0 %v1456, 64
  %v1459 = vpop.permute.xlu0 %1458
  %v1461 = vmul.f32 %v1442, %v1459
  %1463 = vrot.lane.b32.xlu0 %v950, 32
  %v1464 = vpop.permute.xlu0 %1463
  %1467 = vrot.lane.b32.xlu0 %v1023, 64
  %v1468 = vpop.permute.xlu0 %1467
  %1471 = vrot.lane.b32.xlu0 %v1096, 96
  %v1472 = vpop.permute.xlu0 %1471
  %1475 = vrot.lane.b32.xlu0 %v1242, 32
  %v1476 = vpop.permute.xlu0 %1475
  %1479 = vrot.lane.b32.xlu0 %v1315, 64
  %v1480 = vpop.permute.xlu0 %1479
  %1483 = vrot.lane.b32.xlu0 %v1388, 96
  %v1484 = vpop.permute.xlu0 %1483
  %v1486 = vsel %vm172, %v1464, %v1468
  %vm1487 = vcmask 523264
  %v1488 = vsel %vm1487, %v1486, %v1472
  %vm1489 = vcmask 785408
  %v1490 = vsel %vm1489, %v1488, %v1169
  %v1491 = vsel %vm172, %v1476, %v1480
  %v1492 = vsel %vm1487, %v1491, %v1484
  %v1493 = vsel %vm1489, %v1492, %v1461
  %1494 = vst [vmem:[%s10] sm:$0xff] %v1490
  %1495 = vst [vmem:[%s10 + $0x8] sm:$0xff] %v1493
  %v1496 = vpack.c.bf16 %v1490, %v1490
  %v1497 = vpack.c.bf16 %v1493, %v1493
  %v1498 = vld [vmem:[%s7] sm:$0xf]
  %v1499 = vld [vmem:[%s7 + $0x4] sm:$0xf]
  %v1500 = vld [vmem:[%s7 + $0x8] sm:$0xf]
  %v1501 = vld [vmem:[%s7 + $0xc] sm:$0xf]
  %v1502 = vld [vmem:[%s7 + $0x10] sm:$0xf]
  %v1503 = vld [vmem:[%s7 + $0x14] sm:$0xf]
  %v1504 = vld [vmem:[%s7 + $0x18] sm:$0xf]
  %v1505 = vld [vmem:[%s7 + $0x1c] sm:$0xf]
  %v1506 = vld [vmem:[%s7 + $0x20] sm:$0xf]
  %v1507 = vld [vmem:[%s7 + $0x24] sm:$0xf]
  %v1508 = vld [vmem:[%s7 + $0x28] sm:$0xf]
  %v1509 = vld [vmem:[%s7 + $0x2c] sm:$0xf]
  %v1510 = vld [vmem:[%s7 + $0x30] sm:$0xf]
  %v1511 = vld [vmem:[%s7 + $0x34] sm:$0xf]
  %v1512 = vld [vmem:[%s7 + $0x38] sm:$0xf]
  %v1513 = vld [vmem:[%s7 + $0x3c] sm:$0xf]
  %v1514 = vld [vmem:[%s7 + $0x40] sm:$0xf]
  %v1515 = vld [vmem:[%s7 + $0x44] sm:$0xf]
  %v1516 = vld [vmem:[%s7 + $0x48] sm:$0xf]
  %v1517 = vld [vmem:[%s7 + $0x4c] sm:$0xf]
  %v1518 = vld [vmem:[%s7 + $0x50] sm:$0xf]
  %v1519 = vld [vmem:[%s7 + $0x54] sm:$0xf]
  %v1520 = vld [vmem:[%s7 + $0x58] sm:$0xf]
  %v1521 = vld [vmem:[%s7 + $0x5c] sm:$0xf]
  %v1522 = vld [vmem:[%s7 + $0x60] sm:$0xf]
  %v1523 = vld [vmem:[%s7 + $0x64] sm:$0xf]
  %v1524 = vld [vmem:[%s7 + $0x68] sm:$0xf]
  %v1525 = vld [vmem:[%s7 + $0x6c] sm:$0xf]
  %v1526 = vld [vmem:[%s7 + $0x70] sm:$0xf]
  %v1527 = vld [vmem:[%s7 + $0x74] sm:$0xf]
  %v1528 = vld [vmem:[%s7 + $0x78] sm:$0xf]
  %v1529 = vld [vmem:[%s7 + $0x7c] sm:$0xf]
  %v1530 = vld [vmem:[%s8] sm:$0x1]
  %v1532 = vlaneseq
  %v1533 = vshrl.u32 %v1532, 7
  %v1534 = vsub.s32 0, %v1533
  %v1535 = vrot.slane %v1530, %v1534
  %v1569 = vunpack.c.l.b16 %v1498
  %v1570 = vunpack.c.l.b16 %v1499
  %v1571 = vunpack.c.l.b16 %v1500
  %v1572 = vunpack.c.l.b16 %v1501
  %v1573 = vunpack.c.l.b16 %v1502
  %v1574 = vunpack.c.l.b16 %v1503
  %v1575 = vunpack.c.l.b16 %v1504
  %v1576 = vunpack.c.l.b16 %v1505
  %v1577 = vunpack.c.l.b16 %v1506
  %v1578 = vunpack.c.l.b16 %v1507
  %v1579 = vunpack.c.l.b16 %v1508
  %v1580 = vunpack.c.l.b16 %v1509
  %v1581 = vunpack.c.l.b16 %v1510
  %v1582 = vunpack.c.l.b16 %v1511
  %v1583 = vunpack.c.l.b16 %v1512
  %v1584 = vunpack.c.l.b16 %v1513
  %v1585 = vunpack.c.l.b16 %v1514
  %v1586 = vunpack.c.l.b16 %v1515
  %v1587 = vunpack.c.l.b16 %v1516
  %v1588 = vunpack.c.l.b16 %v1517
  %v1589 = vunpack.c.l.b16 %v1518
  %v1590 = vunpack.c.l.b16 %v1519
  %v1591 = vunpack.c.l.b16 %v1520
  %v1592 = vunpack.c.l.b16 %v1521
  %v1593 = vunpack.c.l.b16 %v1522
  %v1594 = vunpack.c.l.b16 %v1523
  %v1595 = vunpack.c.l.b16 %v1524
  %v1596 = vunpack.c.l.b16 %v1525
  %v1597 = vunpack.c.l.b16 %v1526
  %v1598 = vunpack.c.l.b16 %v1527
  %v1599 = vunpack.c.l.b16 %v1528
  %v1600 = vunpack.c.l.b16 %v1529
  %v1601 = vpack.c.b16 %v1570, %v1569
  %v1602 = vpack.c.b16 %v1572, %v1571
  %v1603 = vpack.c.b16 %v1574, %v1573
  %v1604 = vpack.c.b16 %v1576, %v1575
  %v1605 = vpack.c.b16 %v1578, %v1577
  %v1606 = vpack.c.b16 %v1580, %v1579
  %v1607 = vpack.c.b16 %v1582, %v1581
  %v1608 = vpack.c.b16 %v1584, %v1583
  %v1609 = vpack.c.b16 %v1586, %v1585
  %v1610 = vpack.c.b16 %v1588, %v1587
  %v1611 = vpack.c.b16 %v1590, %v1589
  %v1612 = vpack.c.b16 %v1592, %v1591
  %v1613 = vpack.c.b16 %v1594, %v1593
  %v1614 = vpack.c.b16 %v1596, %v1595
  %v1615 = vpack.c.b16 %v1598, %v1597
  %v1616 = vpack.c.b16 %v1600, %v1599
  %1633 = vmatprep.subr.bf16.mxu0 0
  %1634 = vmatpush1.bf16.msra.mxu0 %v1601
  %1635 = vmatprep.subr.bf16.mxu0 0
  %1636 = vmatpush1.bf16.msra.mxu0 %v1602
  %1637 = vmatprep.subr.bf16.mxu0 0
  %1638 = vmatpush1.bf16.msra.mxu0 %v1603
  %1639 = vmatprep.subr.bf16.mxu0 0
  %1640 = vmatpush1.bf16.msra.mxu0 %v1604
  %1641 = vmatprep.subr.bf16.mxu0 0
  %1642 = vmatpush1.bf16.msra.mxu0 %v1605
  %1643 = vmatprep.subr.bf16.mxu0 0
  %1644 = vmatpush1.bf16.msra.mxu0 %v1606
  %1645 = vmatprep.subr.bf16.mxu0 0
  %1646 = vmatpush1.bf16.msra.mxu0 %v1607
  %1647 = vmatprep.subr.bf16.mxu0 0
  %1648 = vmatpush1.bf16.msra.mxu0 %v1608
  %1649 = vmatprep.subr.bf16.mxu0 0
  %1650 = vmatpush1.bf16.msra.mxu0 %v1609
  %1651 = vmatprep.subr.bf16.mxu0 0
  %1652 = vmatpush1.bf16.msra.mxu0 %v1610
  %1653 = vmatprep.subr.bf16.mxu0 0
  %1654 = vmatpush1.bf16.msra.mxu0 %v1611
  %1655 = vmatprep.subr.bf16.mxu0 0
  %1656 = vmatpush1.bf16.msra.mxu0 %v1612
  %1657 = vmatprep.subr.bf16.mxu0 0
  %1658 = vmatpush1.bf16.msra.mxu0 %v1613
  %1659 = vmatprep.subr.bf16.mxu0 0
  %1660 = vmatpush1.bf16.msra.mxu0 %v1614
  %1661 = vmatprep.subr.bf16.mxu0 0
  %1662 = vmatpush1.bf16.msra.mxu0 %v1615
  %1663 = vmatprep.subr.bf16.mxu0 0
  %1664 = vmatpush1.bf16.msra.mxu0 %v1616
  %1665 = vmatprep.mubr.bf16.mxu0 %v1497
  %1666 = vmatmul.mubr.bf16.gmra.mrb[0].mxu0 %v1496
  %v1667 = vpop.f32.mrb[0].mxu0
  %v1668 = vadd.f32 %v1535, %v1667
  %v1669 = vpop.f32.mrb[0].mxu0
  %v1670 = vpop.f32.mrb[0].mxu0
  %v1671 = vpop.f32.mrb[0].mxu0
  %1672 = vdwg.mxu0
  %vm1673 = vcmask 31744
  %1674 = vst.msk [vmem:[%s9] sm:$0xff] %vm1673, %v1668
  // Predicated region
  $region38: #{lstm_classification_forward.1} parent=0 // pred_check
    _
  $region39: #{lstm_classification_forward.1} parent=0 // pred_check_branch
    %1676 = sbr.rel (0) target = $region41
  $region40: #{lstm_classification_forward.1} parent=0 // pred_region
    _
  $region41: #{lstm_classification_forward.1} parent=0 // pred_fallthru
    _
  // Predicated region
  $region42: #{lstm_classification_forward.1} parent=0 // pred_check
    _
  $region43: #{lstm_classification_forward.1} parent=0 // pred_check_branch
    %1678 = sbr.rel (0) target = $region45
  $region44: #{lstm_classification_forward.1} parent=0 // pred_region
    _
  $region45: #{lstm_classification_forward.1} parent=0 // pred_fallthru
    _
  // Predicated region
  $region46: #{lstm_classification_forward.1} parent=0 // pred_check
    _
  $region47: #{lstm_classification_forward.1} parent=0 // pred_check_branch
    %1680 = sbr.rel (0) target = $region49
  $region48: #{lstm_classification_forward.1} parent=0 // pred_region
    _
  $region49: #{lstm_classification_forward.1} parent=0 // pred_fallthru
    _
  // Predicated region
  $region50: #{lstm_classification_forward.1} parent=0 // pred_check
    _
  $region51: #{lstm_classification_forward.1} parent=0 // pred_check_branch
    %1682 = sbr.rel (0) target = $region53
  $region52: #{lstm_classification_forward.1} parent=0 // pred_region
    _
  $region53: #{lstm_classification_forward.1} parent=0 // pred_fallthru
    _

</llo_original>
